<compile_context>
chip_gen: v7x
topology: tpu7x:2x2x1
jax: 0.10.0
libtpu: 0.0.40
codegen_flags: <defaults>
</compile_context>

<pallas_src>
import functools

import jax
import jax.numpy as jnp
from jax import lax
from jax.experimental import pallas as pl
from jax.experimental.pallas import tpu as pltpu


def _round_up(x, m):
    return (x + m - 1) // m * m


def _tpu_vmem_capacity_bytes():
    """Trace-time VMEM capacity query with a conservative fallback (v7x per-TC)."""
    try:
        cap = getattr(pltpu.get_tpu_info(), "vmem_capacity_bytes", None)
        if cap:
            return int(cap)
    except Exception:
        pass
    return 64 << 20


def _choose_t_chunk(T, BT, I, Hp):
    """Timesteps per grid chunk, sized so 2x(x chunk) + xp scratch stay well under VMEM."""
    cap = _tpu_vmem_capacity_bytes()
    budget = max(2 << 20, min(cap // 6, 12 << 20))
    # per timestep: double-buffered f32 x rows + f32 xp scratch rows
    per_step = BT * I * 4 * 2 + BT * 3 * Hp * 4
    tc = max(1, budget // per_step)
    return int(min(tc, T, 512))


# ---------------------------------------------------------------------------
# Fused kernel: per (batch-tile, time-chunk) grid step
#   xp   = x_chunk @ [W_ir|W_iz|W_in] + b_fused          (one bf16 MXU matmul)
#   loop t in chunk:
#     hp = h @ [W_hr|W_hz|W_hn]                          (bf16 MXU, f32 acc)
#     rz = sigmoid(xp[:, :2Hp] + hp[:, :2Hp])            (fused r|z slab)
#     n  = tanh(xp[:, 2Hp:] + r * (hp[:, 2Hp:] + b_hn))
#     h  = n + z * (h - n)                               (== (1-z)*n + z*h)
#   at last chunk: out = h @ fc_w + fc_b                 (lane-dense 128-wide)
# ---------------------------------------------------------------------------
def _gru_chunk_kernel(x_ref, w_i_ref, b_x_ref, w_h_ref, b_hn_ref, fc_w_ref,
                      fc_b_ref, out_ref, h_ref, xp_ref, *, seq_len):
    t_idx = pl.program_id(1)
    Tc, BT, I = x_ref.shape
    Hp = h_ref.shape[-1]

    @pl.when(t_idx == 0)
    def _():
        h_ref[...] = jnp.zeros_like(h_ref)

    # Chunk-wide input projection (fused; no X_proj HBM round trip).
    x_flat = x_ref[...].reshape(Tc * BT, I).astype(jnp.bfloat16)
    xp = jnp.dot(x_flat, w_i_ref[...], preferred_element_type=jnp.float32)
    xp_ref[...] = (xp + b_x_ref[...]).reshape(Tc, BT, 3 * Hp)

    # Hoist broadcasts / weight loads out of the time loop.
    b_hn = jnp.broadcast_to(b_hn_ref[...], (BT, Hp))
    w_h = w_h_ref[...]  # bf16, VMEM-resident across the whole grid

    def step(t, h):
        xp_t = xp_ref[t]                                          # (BT, 3Hp) f32
        hp = jnp.dot(h.astype(jnp.bfloat16), w_h,
                     preferred_element_type=jnp.float32)          # (BT, 3Hp)
        rz = jax.nn.sigmoid(xp_t[:, : 2 * Hp] + hp[:, : 2 * Hp])
        r = rz[:, :Hp]
        z = rz[:, Hp:]
        n = jnp.tanh(xp_t[:, 2 * Hp:] + r * (hp[:, 2 * Hp:] + b_hn))
        h_new = n + z * (h - n)
        # Mask timesteps that only exist because T was padded to a chunk multiple.
        valid = (t_idx * Tc + t) < seq_len
        return jnp.where(valid, h_new, h)

    unroll = Tc if Tc <= 32 else 8
    h_last = lax.fori_loop(0, Tc, step, h_ref[...], unroll=unroll)
    h_ref[...] = h_last

    @pl.when(t_idx == pl.num_programs(1) - 1)
    def _():
        out_ref[...] = (
            jnp.dot(h_last, fc_w_ref[...], preferred_element_type=jnp.float32)
            + fc_b_ref[...]
        )


@jax.jit
def gru_model_forward(x, params):
    """x: (B, T, I) float32 (batch_first, like PyTorch). Returns (B, 1) float32."""
    B, T, I = x.shape
    H = params["w_hr"].shape[0]
    Bp = _round_up(B, 8)        # sublane alignment
    Hp = _round_up(H, 128)      # lane alignment -> gate slices on 128 boundaries
    FP = 128                    # lane-dense FC output width (column 0 is real)
    BT = 8                      # batch rows per grid tile (parallel axis for v7x)
    nb = Bp // BT

    f32, bf16 = jnp.float32, jnp.bfloat16

    # ---- fuse + pad parameters -------------------------------------------
    def pad_cols(w):                      # (rows, H) -> (rows, Hp)
        return jnp.pad(w, ((0, 0), (0, Hp - H)))

    def pad_vec(v):                       # (H,) -> (1, Hp)
        return jnp.pad(v, (0, Hp - H)).reshape(1, Hp)

    w_i = jnp.concatenate(
        [pad_cols(params["w_ir"]), pad_cols(params["w_iz"]), pad_cols(params["w_in"])],
        axis=1,
    ).astype(bf16)                                              # (I, 3Hp)
    w_h = jnp.pad(
        jnp.concatenate(
            [pad_cols(params["w_hr"]), pad_cols(params["w_hz"]), pad_cols(params["w_hn"])],
            axis=1,
        ),
        ((0, Hp - H), (0, 0)),
    ).astype(bf16)                                              # (Hp, 3Hp)

    # b_ir+b_hr and b_iz+b_hz fold into the projection bias; b_in rides with it;
    # b_hn stays inside r*(...) per PyTorch semantics.
    b_x = jnp.concatenate(
        [
            pad_vec(params["b_ir"] + params["b_hr"]),
            pad_vec(params["b_iz"] + params["b_hz"]),
            pad_vec(params["b_in"]),
        ],
        axis=1,
    ).astype(f32)                                               # (1, 3Hp)
    b_hn = pad_vec(params["b_hn"]).astype(f32)                  # (1, Hp)

    fc_w = jnp.zeros((Hp, FP), f32).at[:H, 0].set(params["fc_w"])
    fc_b = jnp.zeros((1, FP), f32).at[0, 0].set(params["fc_b"])

    # ---- chunking over T (streamed; never fully VMEM resident) ------------
    Tc = _choose_t_chunk(T, BT, I, Hp)
    nt = pl.cdiv(T, Tc)
    Tp = nt * Tc

    # Time-major, pad batch and time; padded timesteps are masked in-kernel.
    x_tm = jnp.transpose(x, (1, 0, 2))                          # (T, B, I)
    x_tm = jnp.pad(x_tm, ((0, Tp - T), (0, Bp - B), (0, 0))).astype(f32)

    vmem_cap = _tpu_vmem_capacity_bytes()
    vmem_limit = int(min(vmem_cap * 3 // 4, 64 << 20))

    flops = (2 * Tp * Bp * I * 3 * Hp          # input projection
             + 2 * Tp * Bp * Hp * 3 * Hp       # recurrent matmuls
             + 2 * Bp * Hp * FP)               # final FC
    transcendentals = 3 * Tp * Bp * Hp
    bytes_accessed = (x_tm.size * 4 + (w_i.size + w_h.size) * 2
                      + (b_x.size + b_hn.size + fc_w.size + fc_b.size) * 4
                      + Bp * FP * 4)

    kernel = functools.partial(_gru_chunk_kernel, seq_len=T)

    out_padded = pl.pallas_call(
        kernel,
        out_shape=jax.ShapeDtypeStruct((Bp, FP), f32),
        grid=(nb, nt),
        in_specs=[
            pl.BlockSpec((Tc, BT, I), lambda b, t: (t, b, 0)),    # x chunk (streamed)
            pl.BlockSpec((I, 3 * Hp), lambda b, t: (0, 0)),       # W_i   (resident)
            pl.BlockSpec((1, 3 * Hp), lambda b, t: (0, 0)),       # fused bias
            pl.BlockSpec((Hp, 3 * Hp), lambda b, t: (0, 0)),      # W_h   (resident)
            pl.BlockSpec((1, Hp), lambda b, t: (0, 0)),           # b_hn
            pl.BlockSpec((Hp, FP), lambda b, t: (0, 0)),          # fc_w
            pl.BlockSpec((1, FP), lambda b, t: (0, 0)),           # fc_b
        ],
        out_specs=pl.BlockSpec((BT, FP), lambda b, t: (b, 0)),
        scratch_shapes=[
            pltpu.VMEM((BT, Hp), f32),              # hidden-state carry
            pltpu.VMEM((Tc, BT, 3 * Hp), f32),      # chunk input projection
        ],
        compiler_params=pltpu.CompilerParams(
            dimension_semantics=("parallel", "arbitrary"),
            vmem_limit_bytes=vmem_limit,
        ),
        cost_estimate=pl.CostEstimate(
            flops=flops,
            transcendentals=transcendentals,
            bytes_accessed=bytes_accessed,
        ),
    )(x_tm, w_i, b_x, w_h, b_hn, fc_w, fc_b)

    return out_padded[:B, :1]


# ---------------------------------------------------------------------------
# Parameter init (mirrors PyTorch U(-1/sqrt(H), 1/sqrt(H)) defaults)
# ---------------------------------------------------------------------------
def init_params(key, input_size, hidden_size):
    bound = 1.0 / jnp.sqrt(jnp.float32(hidden_size))
    ks = jax.random.split(key, 10)

    def u(k, shape):
        return jax.random.uniform(k, shape, jnp.float32, -bound, bound)

    w_ir, w_iz, w_in = (u(ks[i], (input_size, hidden_size)) for i in range(3))
    w_hr, w_hz, w_hn = (u(ks[3 + i], (hidden_size, hidden_size)) for i in range(3))
    b_ih = u(ks[6], (3, hidden_size))   # (b_ir, b_iz, b_in)
    b_hh = u(ks[7], (3, hidden_size))   # (b_hr, b_hz, b_hn)
    fc_w = u(ks[8], (hidden_size,))     # Linear(hidden, 1) weight
    fc_b = u(ks[9], ())

    return {
        "w_ir": w_ir, "w_iz": w_iz, "w_in": w_in,
        "w_hr": w_hr, "w_hz": w_hz, "w_hn": w_hn,
        "b_ir": b_ih[0], "b_iz": b_ih[1], "b_in": b_ih[2],
        "b_hr": b_hh[0], "b_hz": b_hh[1], "b_hn": b_hh[2],
        "fc_w": fc_w, "fc_b": fc_b,
    }


# ---------------------------------------------------------------------------
# Pure-JAX f32 reference (PyTorch nn.GRU semantics) for a sanity check
# ---------------------------------------------------------------------------
def gru_model_reference(x, params):
    B, T, I = x.shape
    H = params["w_hr"].shape[0]
    h = jnp.zeros((B, H), jnp.float32)
    for t in range(T):
        x_t = x[:, t, :]
        r = jax.nn.sigmoid(x_t @ params["w_ir"] + params["b_ir"]
                           + h @ params["w_hr"] + params["b_hr"])
        z = jax.nn.sigmoid(x_t @ params["w_iz"] + params["b_iz"]
                           + h @ params["w_hz"] + params["b_hz"])
        n = jnp.tanh(x_t @ params["w_in"] + params["b_in"]
                     + r * (h @ params["w_hn"] + params["b_hn"]))
        h = (1.0 - z) * n + z * h
    return h @ params["fc_w"].reshape(H, 1) + params["fc_b"]


if __name__ == "__main__":
    B, T, I, H = 2, 8, 16, 32
    key = jax.random.PRNGKey(0)
    k_x, k_p = jax.random.split(key)

    x = jax.random.normal(k_x, (B, T, I), jnp.float32)
    params = init_params(k_p, I, H)

    out = jax.block_until_ready(gru_model_forward(x, params))
    ref = gru_model_reference(x, params)

    assert out.shape == (B, 1), out.shape
    # bf16 MXU operands (f32 accumulation) -> allow small drift vs the f32 reference.
    assert jnp.allclose(out, ref, atol=2e-2, rtol=2e-2), (out, ref)

    print("KERNEL_OK")
</pallas_src>

<mosaic_0001>
module attributes {stable_mosaic.version = 11 : i64} {
  func.func @_gru_chunk_kernel(%arg0: i32, %arg1: i32, %arg2: memref<8x8x16xf32, #tpu.memory_space<vmem>>, %arg3: memref<16x384xbf16, #tpu.memory_space<vmem>>, %arg4: memref<1x384xf32, #tpu.memory_space<vmem>>, %arg5: memref<128x384xbf16, #tpu.memory_space<vmem>>, %arg6: memref<1x128xf32, #tpu.memory_space<vmem>>, %arg7: memref<128x128xf32, #tpu.memory_space<vmem>>, %arg8: memref<1x128xf32, #tpu.memory_space<vmem>>, %arg9: memref<8x128xf32, #tpu.memory_space<vmem>>, %arg10: memref<8x128xf32, #tpu.memory_space<vmem>>, %arg11: memref<8x8x384xf32, #tpu.memory_space<vmem>>) attributes {dimension_semantics = [#tpu.dimension_semantics<parallel>, #tpu.dimension_semantics<arbitrary>], iteration_bounds = array<i64: 1, 1>, scalar_prefetch = 0 : i64, scratch_operands = 2 : i64, tpu.core_type = #tpu.core_type<tc>, window_params = [{transform_indices = @transform_0, window_bounds = array<i64: 8, 8, 16>}, {pipeline_mode = #tpu.pipeline_mode<synchronous>, transform_indices = @transform_1, window_bounds = array<i64: 16, 384>}, {pipeline_mode = #tpu.pipeline_mode<synchronous>, transform_indices = @transform_2, window_bounds = array<i64: 1, 384>}, {pipeline_mode = #tpu.pipeline_mode<synchronous>, transform_indices = @transform_3, window_bounds = array<i64: 128, 384>}, {pipeline_mode = #tpu.pipeline_mode<synchronous>, transform_indices = @transform_4, window_bounds = array<i64: 1, 128>}, {pipeline_mode = #tpu.pipeline_mode<synchronous>, transform_indices = @transform_5, window_bounds = array<i64: 128, 128>}, {pipeline_mode = #tpu.pipeline_mode<synchronous>, transform_indices = @transform_6, window_bounds = array<i64: 1, 128>}, {transform_indices = @transform_7, window_bounds = array<i64: 8, 128>}]} {
    %c0_i32 = arith.constant 0 : i32
    %0 = arith.cmpi eq, %arg1, %c0_i32 : i32
    %1 = arith.extui %0 : i1 to i32
    %c0_i32_0 = arith.constant 0 : i32
    %2 = arith.cmpi ne, %1, %c0_i32_0 : i32
    scf.if %2 {
      %cst_69 = arith.constant 0.000000e+00 : f32
      %246 = vector.broadcast %cst_69 : f32 to vector<8x128xf32>
      %c0_70 = arith.constant 0 : index
      %c0_71 = arith.constant 0 : index
      %247 = vector.load %arg10[%c0_70, %c0_71] : memref<8x128xf32, #tpu.memory_space<vmem>>, vector<8x128xf32>
      tpu.vector_store %arg10[%c0_70, %c0_71], %246 {strides = array<i32>} : memref<8x128xf32, #tpu.memory_space<vmem>>, vector<8x128xf32>,
    } else {
    }
    %c0 = arith.constant 0 : index
    %c0_1 = arith.constant 0 : index
    %c0_2 = arith.constant 0 : index
    %3 = vector.load %arg2[%c0, %c0_1, %c0_2] : memref<8x8x16xf32, #tpu.memory_space<vmem>>, vector<8x8x16xf32>
    %4 = vector.shape_cast %3 : vector<8x8x16xf32> to vector<64x16xf32>
    %5 = arith.truncf %4 : vector<64x16xf32> to vector<64x16xbf16>
    %c0_3 = arith.constant 0 : index
    %c0_4 = arith.constant 0 : index
    %6 = vector.load %arg3[%c0_3, %c0_4] : memref<16x384xbf16, #tpu.memory_space<vmem>>, vector<16x384xbf16>
    %cst = arith.constant dense<0.000000e+00> : vector<64x384xf32>
    %7 = tpu.matmul %5, %6, %cst {dimension_numbers = #tpu.dot_dimension_numbers<[1], [0], [0], [1], [0, 0, 1, 1], [], []>} : vector<64x16xbf16>, vector<16x384xbf16>, vector<64x384xf32> -> vector<64x384xf32>
    %c0_5 = arith.constant 0 : index
    %c0_6 = arith.constant 0 : index
    %8 = vector.load %arg4[%c0_5, %c0_6] : memref<1x384xf32, #tpu.memory_space<vmem>>, vector<1x384xf32>
    %9 = vector.broadcast %8 : vector<1x384xf32> to vector<64x384xf32>
    %10 = arith.addf %7, %9 : vector<64x384xf32>
    %11 = vector.shape_cast %10 : vector<64x384xf32> to vector<8x8x384xf32>
    %c0_7 = arith.constant 0 : index
    %c0_8 = arith.constant 0 : index
    %c0_9 = arith.constant 0 : index
    %12 = vector.load %arg11[%c0_7, %c0_8, %c0_9] : memref<8x8x384xf32, #tpu.memory_space<vmem>>, vector<8x8x384xf32>
    tpu.vector_store %arg11[%c0_7, %c0_8, %c0_9], %11 {strides = array<i32>} : memref<8x8x384xf32, #tpu.memory_space<vmem>>, vector<8x8x384xf32>,
    %c0_10 = arith.constant 0 : index
    %c0_11 = arith.constant 0 : index
    %13 = vector.load %arg6[%c0_10, %c0_11] : memref<1x128xf32, #tpu.memory_space<vmem>>, vector<1x128xf32>
    %14 = vector.shape_cast %13 : vector<1x128xf32> to vector<1x128xf32>
    %15 = vector.broadcast %14 : vector<1x128xf32> to vector<8x128xf32>
    %c0_12 = arith.constant 0 : index
    %c0_13 = arith.constant 0 : index
    %16 = vector.load %arg5[%c0_12, %c0_13] : memref<128x384xbf16, #tpu.memory_space<vmem>>, vector<128x384xbf16>
    %c0_14 = arith.constant 0 : index
    %c0_15 = arith.constant 0 : index
    %17 = vector.load %arg10[%c0_14, %c0_15] : memref<8x128xf32, #tpu.memory_space<vmem>>, vector<8x128xf32>
    %c0_i32_16 = arith.constant 0 : i32
    %18 = arith.index_cast %c0_i32_16 : i32 to index
    %c0_17 = arith.constant 0 : index
    %c0_18 = arith.constant 0 : index
    %19 = vector.load %arg11[%18, %c0_17, %c0_18] : memref<8x8x384xf32, #tpu.memory_space<vmem>>, vector<1x8x384xf32>
    %20 = vector.shape_cast %19 : vector<1x8x384xf32> to vector<8x384xf32>
    %21 = arith.truncf %17 : vector<8x128xf32> to vector<8x128xbf16>
    %cst_19 = arith.constant dense<0.000000e+00> : vector<8x384xf32>
    %22 = tpu.matmul %21, %16, %cst_19 {dimension_numbers = #tpu.dot_dimension_numbers<[1], [0], [0], [1], [0, 0, 1, 1], [], []>} : vector<8x128xbf16>, vector<128x384xbf16>, vector<8x384xf32> -> vector<8x384xf32>
    %23 = vector.extract_strided_slice %20 {offsets = [0, 0], sizes = [8, 256], strides = [1, 1]} : vector<8x384xf32> to vector<8x256xf32>
    %24 = vector.extract_strided_slice %22 {offsets = [0, 0], sizes = [8, 256], strides = [1, 1]} : vector<8x384xf32> to vector<8x256xf32>
    %25 = arith.addf %23, %24 : vector<8x256xf32>
    %26 = arith.negf %25 : vector<8x256xf32>
    %27 = math.exp %26 : vector<8x256xf32>
    %cst_20 = arith.constant 1.000000e+00 : f32
    %28 = vector.broadcast %cst_20 : f32 to vector<8x256xf32>
    %29 = arith.addf %28, %27 : vector<8x256xf32>
    %30 = arith.divf %28, %29 : vector<8x256xf32>
    %31 = vector.extract_strided_slice %30 {offsets = [0, 0], sizes = [8, 128], strides = [1, 1]} : vector<8x256xf32> to vector<8x128xf32>
    %32 = vector.extract_strided_slice %30 {offsets = [0, 128], sizes = [8, 128], strides = [1, 1]} : vector<8x256xf32> to vector<8x128xf32>
    %33 = vector.extract_strided_slice %20 {offsets = [0, 256], sizes = [8, 128], strides = [1, 1]} : vector<8x384xf32> to vector<8x128xf32>
    %34 = vector.extract_strided_slice %22 {offsets = [0, 256], sizes = [8, 128], strides = [1, 1]} : vector<8x384xf32> to vector<8x128xf32>
    %35 = arith.addf %34, %15 : vector<8x128xf32>
    %36 = arith.mulf %31, %35 : vector<8x128xf32>
    %37 = arith.addf %33, %36 : vector<8x128xf32>
    %38 = math.tanh %37 : vector<8x128xf32>
    %39 = arith.subf %17, %38 : vector<8x128xf32>
    %40 = arith.mulf %32, %39 : vector<8x128xf32>
    %41 = arith.addf %38, %40 : vector<8x128xf32>
    %c8_i32 = arith.constant 8 : i32
    %42 = arith.muli %arg1, %c8_i32 : i32
    %43 = arith.addi %42, %c0_i32_16 : i32
    %c8_i32_21 = arith.constant 8 : i32
    %44 = arith.cmpi slt, %43, %c8_i32_21 : i32
    %45 = arith.select %44, %41, %17 : vector<8x128xf32>
    %c1_i32 = arith.constant 1 : i32
    %46 = arith.index_cast %c1_i32 : i32 to index
    %c0_22 = arith.constant 0 : index
    %c0_23 = arith.constant 0 : index
    %47 = vector.load %arg11[%46, %c0_22, %c0_23] : memref<8x8x384xf32, #tpu.memory_space<vmem>>, vector<1x8x384xf32>
    %48 = vector.shape_cast %47 : vector<1x8x384xf32> to vector<8x384xf32>
    %49 = arith.truncf %45 : vector<8x128xf32> to vector<8x128xbf16>
    %cst_24 = arith.constant dense<0.000000e+00> : vector<8x384xf32>
    %50 = tpu.matmul %49, %16, %cst_24 {dimension_numbers = #tpu.dot_dimension_numbers<[1], [0], [0], [1], [0, 0, 1, 1], [], []>} : vector<8x128xbf16>, vector<128x384xbf16>, vector<8x384xf32> -> vector<8x384xf32>
    %51 = vector.extract_strided_slice %48 {offsets = [0, 0], sizes = [8, 256], strides = [1, 1]} : vector<8x384xf32> to vector<8x256xf32>
    %52 = vector.extract_strided_slice %50 {offsets = [0, 0], sizes = [8, 256], strides = [1, 1]} : vector<8x384xf32> to vector<8x256xf32>
    %53 = arith.addf %51, %52 : vector<8x256xf32>
    %54 = arith.negf %53 : vector<8x256xf32>
    %55 = math.exp %54 : vector<8x256xf32>
    %cst_25 = arith.constant 1.000000e+00 : f32
    %56 = vector.broadcast %cst_25 : f32 to vector<8x256xf32>
    %57 = arith.addf %56, %55 : vector<8x256xf32>
    %58 = arith.divf %56, %57 : vector<8x256xf32>
    %59 = vector.extract_strided_slice %58 {offsets = [0, 0], sizes = [8, 128], strides = [1, 1]} : vector<8x256xf32> to vector<8x128xf32>
    %60 = vector.extract_strided_slice %58 {offsets = [0, 128], sizes = [8, 128], strides = [1, 1]} : vector<8x256xf32> to vector<8x128xf32>
    %61 = vector.extract_strided_slice %48 {offsets = [0, 256], sizes = [8, 128], strides = [1, 1]} : vector<8x384xf32> to vector<8x128xf32>
    %62 = vector.extract_strided_slice %50 {offsets = [0, 256], sizes = [8, 128], strides = [1, 1]} : vector<8x384xf32> to vector<8x128xf32>
    %63 = arith.addf %62, %15 : vector<8x128xf32>
    %64 = arith.mulf %59, %63 : vector<8x128xf32>
    %65 = arith.addf %61, %64 : vector<8x128xf32>
    %66 = math.tanh %65 : vector<8x128xf32>
    %67 = arith.subf %45, %66 : vector<8x128xf32>
    %68 = arith.mulf %60, %67 : vector<8x128xf32>
    %69 = arith.addf %66, %68 : vector<8x128xf32>
    %c8_i32_26 = arith.constant 8 : i32
    %70 = arith.muli %arg1, %c8_i32_26 : i32
    %71 = arith.addi %70, %c1_i32 : i32
    %c8_i32_27 = arith.constant 8 : i32
    %72 = arith.cmpi slt, %71, %c8_i32_27 : i32
    %73 = arith.select %72, %69, %45 : vector<8x128xf32>
    %c2_i32 = arith.constant 2 : i32
    %74 = arith.index_cast %c2_i32 : i32 to index
    %c0_28 = arith.constant 0 : index
    %c0_29 = arith.constant 0 : index
    %75 = vector.load %arg11[%74, %c0_28, %c0_29] : memref<8x8x384xf32, #tpu.memory_space<vmem>>, vector<1x8x384xf32>
    %76 = vector.shape_cast %75 : vector<1x8x384xf32> to vector<8x384xf32>
    %77 = arith.truncf %73 : vector<8x128xf32> to vector<8x128xbf16>
    %cst_30 = arith.constant dense<0.000000e+00> : vector<8x384xf32>
    %78 = tpu.matmul %77, %16, %cst_30 {dimension_numbers = #tpu.dot_dimension_numbers<[1], [0], [0], [1], [0, 0, 1, 1], [], []>} : vector<8x128xbf16>, vector<128x384xbf16>, vector<8x384xf32> -> vector<8x384xf32>
    %79 = vector.extract_strided_slice %76 {offsets = [0, 0], sizes = [8, 256], strides = [1, 1]} : vector<8x384xf32> to vector<8x256xf32>
    %80 = vector.extract_strided_slice %78 {offsets = [0, 0], sizes = [8, 256], strides = [1, 1]} : vector<8x384xf32> to vector<8x256xf32>
    %81 = arith.addf %79, %80 : vector<8x256xf32>
    %82 = arith.negf %81 : vector<8x256xf32>
    %83 = math.exp %82 : vector<8x256xf32>
    %cst_31 = arith.constant 1.000000e+00 : f32
    %84 = vector.broadcast %cst_31 : f32 to vector<8x256xf32>
    %85 = arith.addf %84, %83 : vector<8x256xf32>
    %86 = arith.divf %84, %85 : vector<8x256xf32>
    %87 = vector.extract_strided_slice %86 {offsets = [0, 0], sizes = [8, 128], strides = [1, 1]} : vector<8x256xf32> to vector<8x128xf32>
    %88 = vector.extract_strided_slice %86 {offsets = [0, 128], sizes = [8, 128], strides = [1, 1]} : vector<8x256xf32> to vector<8x128xf32>
    %89 = vector.extract_strided_slice %76 {offsets = [0, 256], sizes = [8, 128], strides = [1, 1]} : vector<8x384xf32> to vector<8x128xf32>
    %90 = vector.extract_strided_slice %78 {offsets = [0, 256], sizes = [8, 128], strides = [1, 1]} : vector<8x384xf32> to vector<8x128xf32>
    %91 = arith.addf %90, %15 : vector<8x128xf32>
    %92 = arith.mulf %87, %91 : vector<8x128xf32>
    %93 = arith.addf %89, %92 : vector<8x128xf32>
    %94 = math.tanh %93 : vector<8x128xf32>
    %95 = arith.subf %73, %94 : vector<8x128xf32>
    %96 = arith.mulf %88, %95 : vector<8x128xf32>
    %97 = arith.addf %94, %96 : vector<8x128xf32>
    %c8_i32_32 = arith.constant 8 : i32
    %98 = arith.muli %arg1, %c8_i32_32 : i32
    %99 = arith.addi %98, %c2_i32 : i32
    %c8_i32_33 = arith.constant 8 : i32
    %100 = arith.cmpi slt, %99, %c8_i32_33 : i32
    %101 = arith.select %100, %97, %73 : vector<8x128xf32>
    %c3_i32 = arith.constant 3 : i32
    %102 = arith.index_cast %c3_i32 : i32 to index
    %c0_34 = arith.constant 0 : index
    %c0_35 = arith.constant 0 : index
    %103 = vector.load %arg11[%102, %c0_34, %c0_35] : memref<8x8x384xf32, #tpu.memory_space<vmem>>, vector<1x8x384xf32>
    %104 = vector.shape_cast %103 : vector<1x8x384xf32> to vector<8x384xf32>
    %105 = arith.truncf %101 : vector<8x128xf32> to vector<8x128xbf16>
    %cst_36 = arith.constant dense<0.000000e+00> : vector<8x384xf32>
    %106 = tpu.matmul %105, %16, %cst_36 {dimension_numbers = #tpu.dot_dimension_numbers<[1], [0], [0], [1], [0, 0, 1, 1], [], []>} : vector<8x128xbf16>, vector<128x384xbf16>, vector<8x384xf32> -> vector<8x384xf32>
    %107 = vector.extract_strided_slice %104 {offsets = [0, 0], sizes = [8, 256], strides = [1, 1]} : vector<8x384xf32> to vector<8x256xf32>
    %108 = vector.extract_strided_slice %106 {offsets = [0, 0], sizes = [8, 256], strides = [1, 1]} : vector<8x384xf32> to vector<8x256xf32>
    %109 = arith.addf %107, %108 : vector<8x256xf32>
    %110 = arith.negf %109 : vector<8x256xf32>
    %111 = math.exp %110 : vector<8x256xf32>
    %cst_37 = arith.constant 1.000000e+00 : f32
    %112 = vector.broadcast %cst_37 : f32 to vector<8x256xf32>
    %113 = arith.addf %112, %111 : vector<8x256xf32>
    %114 = arith.divf %112, %113 : vector<8x256xf32>
    %115 = vector.extract_strided_slice %114 {offsets = [0, 0], sizes = [8, 128], strides = [1, 1]} : vector<8x256xf32> to vector<8x128xf32>
    %116 = vector.extract_strided_slice %114 {offsets = [0, 128], sizes = [8, 128], strides = [1, 1]} : vector<8x256xf32> to vector<8x128xf32>
    %117 = vector.extract_strided_slice %104 {offsets = [0, 256], sizes = [8, 128], strides = [1, 1]} : vector<8x384xf32> to vector<8x128xf32>
    %118 = vector.extract_strided_slice %106 {offsets = [0, 256], sizes = [8, 128], strides = [1, 1]} : vector<8x384xf32> to vector<8x128xf32>
    %119 = arith.addf %118, %15 : vector<8x128xf32>
    %120 = arith.mulf %115, %119 : vector<8x128xf32>
    %121 = arith.addf %117, %120 : vector<8x128xf32>
    %122 = math.tanh %121 : vector<8x128xf32>
    %123 = arith.subf %101, %122 : vector<8x128xf32>
    %124 = arith.mulf %116, %123 : vector<8x128xf32>
    %125 = arith.addf %122, %124 : vector<8x128xf32>
    %c8_i32_38 = arith.constant 8 : i32
    %126 = arith.muli %arg1, %c8_i32_38 : i32
    %127 = arith.addi %126, %c3_i32 : i32
    %c8_i32_39 = arith.constant 8 : i32
    %128 = arith.cmpi slt, %127, %c8_i32_39 : i32
    %129 = arith.select %128, %125, %101 : vector<8x128xf32>
    %c4_i32 = arith.constant 4 : i32
    %130 = arith.index_cast %c4_i32 : i32 to index
    %c0_40 = arith.constant 0 : index
    %c0_41 = arith.constant 0 : index
    %131 = vector.load %arg11[%130, %c0_40, %c0_41] : memref<8x8x384xf32, #tpu.memory_space<vmem>>, vector<1x8x384xf32>
    %132 = vector.shape_cast %131 : vector<1x8x384xf32> to vector<8x384xf32>
    %133 = arith.truncf %129 : vector<8x128xf32> to vector<8x128xbf16>
    %cst_42 = arith.constant dense<0.000000e+00> : vector<8x384xf32>
    %134 = tpu.matmul %133, %16, %cst_42 {dimension_numbers = #tpu.dot_dimension_numbers<[1], [0], [0], [1], [0, 0, 1, 1], [], []>} : vector<8x128xbf16>, vector<128x384xbf16>, vector<8x384xf32> -> vector<8x384xf32>
    %135 = vector.extract_strided_slice %132 {offsets = [0, 0], sizes = [8, 256], strides = [1, 1]} : vector<8x384xf32> to vector<8x256xf32>
    %136 = vector.extract_strided_slice %134 {offsets = [0, 0], sizes = [8, 256], strides = [1, 1]} : vector<8x384xf32> to vector<8x256xf32>
    %137 = arith.addf %135, %136 : vector<8x256xf32>
    %138 = arith.negf %137 : vector<8x256xf32>
    %139 = math.exp %138 : vector<8x256xf32>
    %cst_43 = arith.constant 1.000000e+00 : f32
    %140 = vector.broadcast %cst_43 : f32 to vector<8x256xf32>
    %141 = arith.addf %140, %139 : vector<8x256xf32>
    %142 = arith.divf %140, %141 : vector<8x256xf32>
    %143 = vector.extract_strided_slice %142 {offsets = [0, 0], sizes = [8, 128], strides = [1, 1]} : vector<8x256xf32> to vector<8x128xf32>
    %144 = vector.extract_strided_slice %142 {offsets = [0, 128], sizes = [8, 128], strides = [1, 1]} : vector<8x256xf32> to vector<8x128xf32>
    %145 = vector.extract_strided_slice %132 {offsets = [0, 256], sizes = [8, 128], strides = [1, 1]} : vector<8x384xf32> to vector<8x128xf32>
    %146 = vector.extract_strided_slice %134 {offsets = [0, 256], sizes = [8, 128], strides = [1, 1]} : vector<8x384xf32> to vector<8x128xf32>
    %147 = arith.addf %146, %15 : vector<8x128xf32>
    %148 = arith.mulf %143, %147 : vector<8x128xf32>
    %149 = arith.addf %145, %148 : vector<8x128xf32>
    %150 = math.tanh %149 : vector<8x128xf32>
    %151 = arith.subf %129, %150 : vector<8x128xf32>
    %152 = arith.mulf %144, %151 : vector<8x128xf32>
    %153 = arith.addf %150, %152 : vector<8x128xf32>
    %c8_i32_44 = arith.constant 8 : i32
    %154 = arith.muli %arg1, %c8_i32_44 : i32
    %155 = arith.addi %154, %c4_i32 : i32
    %c8_i32_45 = arith.constant 8 : i32
    %156 = arith.cmpi slt, %155, %c8_i32_45 : i32
    %157 = arith.select %156, %153, %129 : vector<8x128xf32>
    %c5_i32 = arith.constant 5 : i32
    %158 = arith.index_cast %c5_i32 : i32 to index
    %c0_46 = arith.constant 0 : index
    %c0_47 = arith.constant 0 : index
    %159 = vector.load %arg11[%158, %c0_46, %c0_47] : memref<8x8x384xf32, #tpu.memory_space<vmem>>, vector<1x8x384xf32>
    %160 = vector.shape_cast %159 : vector<1x8x384xf32> to vector<8x384xf32>
    %161 = arith.truncf %157 : vector<8x128xf32> to vector<8x128xbf16>
    %cst_48 = arith.constant dense<0.000000e+00> : vector<8x384xf32>
    %162 = tpu.matmul %161, %16, %cst_48 {dimension_numbers = #tpu.dot_dimension_numbers<[1], [0], [0], [1], [0, 0, 1, 1], [], []>} : vector<8x128xbf16>, vector<128x384xbf16>, vector<8x384xf32> -> vector<8x384xf32>
    %163 = vector.extract_strided_slice %160 {offsets = [0, 0], sizes = [8, 256], strides = [1, 1]} : vector<8x384xf32> to vector<8x256xf32>
    %164 = vector.extract_strided_slice %162 {offsets = [0, 0], sizes = [8, 256], strides = [1, 1]} : vector<8x384xf32> to vector<8x256xf32>
    %165 = arith.addf %163, %164 : vector<8x256xf32>
    %166 = arith.negf %165 : vector<8x256xf32>
    %167 = math.exp %166 : vector<8x256xf32>
    %cst_49 = arith.constant 1.000000e+00 : f32
    %168 = vector.broadcast %cst_49 : f32 to vector<8x256xf32>
    %169 = arith.addf %168, %167 : vector<8x256xf32>
    %170 = arith.divf %168, %169 : vector<8x256xf32>
    %171 = vector.extract_strided_slice %170 {offsets = [0, 0], sizes = [8, 128], strides = [1, 1]} : vector<8x256xf32> to vector<8x128xf32>
    %172 = vector.extract_strided_slice %170 {offsets = [0, 128], sizes = [8, 128], strides = [1, 1]} : vector<8x256xf32> to vector<8x128xf32>
    %173 = vector.extract_strided_slice %160 {offsets = [0, 256], sizes = [8, 128], strides = [1, 1]} : vector<8x384xf32> to vector<8x128xf32>
    %174 = vector.extract_strided_slice %162 {offsets = [0, 256], sizes = [8, 128], strides = [1, 1]} : vector<8x384xf32> to vector<8x128xf32>
    %175 = arith.addf %174, %15 : vector<8x128xf32>
    %176 = arith.mulf %171, %175 : vector<8x128xf32>
    %177 = arith.addf %173, %176 : vector<8x128xf32>
    %178 = math.tanh %177 : vector<8x128xf32>
    %179 = arith.subf %157, %178 : vector<8x128xf32>
    %180 = arith.mulf %172, %179 : vector<8x128xf32>
    %181 = arith.addf %178, %180 : vector<8x128xf32>
    %c8_i32_50 = arith.constant 8 : i32
    %182 = arith.muli %arg1, %c8_i32_50 : i32
    %183 = arith.addi %182, %c5_i32 : i32
    %c8_i32_51 = arith.constant 8 : i32
    %184 = arith.cmpi slt, %183, %c8_i32_51 : i32
    %185 = arith.select %184, %181, %157 : vector<8x128xf32>
    %c6_i32 = arith.constant 6 : i32
    %186 = arith.index_cast %c6_i32 : i32 to index
    %c0_52 = arith.constant 0 : index
    %c0_53 = arith.constant 0 : index
    %187 = vector.load %arg11[%186, %c0_52, %c0_53] : memref<8x8x384xf32, #tpu.memory_space<vmem>>, vector<1x8x384xf32>
    %188 = vector.shape_cast %187 : vector<1x8x384xf32> to vector<8x384xf32>
    %189 = arith.truncf %185 : vector<8x128xf32> to vector<8x128xbf16>
    %cst_54 = arith.constant dense<0.000000e+00> : vector<8x384xf32>
    %190 = tpu.matmul %189, %16, %cst_54 {dimension_numbers = #tpu.dot_dimension_numbers<[1], [0], [0], [1], [0, 0, 1, 1], [], []>} : vector<8x128xbf16>, vector<128x384xbf16>, vector<8x384xf32> -> vector<8x384xf32>
    %191 = vector.extract_strided_slice %188 {offsets = [0, 0], sizes = [8, 256], strides = [1, 1]} : vector<8x384xf32> to vector<8x256xf32>
    %192 = vector.extract_strided_slice %190 {offsets = [0, 0], sizes = [8, 256], strides = [1, 1]} : vector<8x384xf32> to vector<8x256xf32>
    %193 = arith.addf %191, %192 : vector<8x256xf32>
    %194 = arith.negf %193 : vector<8x256xf32>
    %195 = math.exp %194 : vector<8x256xf32>
    %cst_55 = arith.constant 1.000000e+00 : f32
    %196 = vector.broadcast %cst_55 : f32 to vector<8x256xf32>
    %197 = arith.addf %196, %195 : vector<8x256xf32>
    %198 = arith.divf %196, %197 : vector<8x256xf32>
    %199 = vector.extract_strided_slice %198 {offsets = [0, 0], sizes = [8, 128], strides = [1, 1]} : vector<8x256xf32> to vector<8x128xf32>
    %200 = vector.extract_strided_slice %198 {offsets = [0, 128], sizes = [8, 128], strides = [1, 1]} : vector<8x256xf32> to vector<8x128xf32>
    %201 = vector.extract_strided_slice %188 {offsets = [0, 256], sizes = [8, 128], strides = [1, 1]} : vector<8x384xf32> to vector<8x128xf32>
    %202 = vector.extract_strided_slice %190 {offsets = [0, 256], sizes = [8, 128], strides = [1, 1]} : vector<8x384xf32> to vector<8x128xf32>
    %203 = arith.addf %202, %15 : vector<8x128xf32>
    %204 = arith.mulf %199, %203 : vector<8x128xf32>
    %205 = arith.addf %201, %204 : vector<8x128xf32>
    %206 = math.tanh %205 : vector<8x128xf32>
    %207 = arith.subf %185, %206 : vector<8x128xf32>
    %208 = arith.mulf %200, %207 : vector<8x128xf32>
    %209 = arith.addf %206, %208 : vector<8x128xf32>
    %c8_i32_56 = arith.constant 8 : i32
    %210 = arith.muli %arg1, %c8_i32_56 : i32
    %211 = arith.addi %210, %c6_i32 : i32
    %c8_i32_57 = arith.constant 8 : i32
    %212 = arith.cmpi slt, %211, %c8_i32_57 : i32
    %213 = arith.select %212, %209, %185 : vector<8x128xf32>
    %c7_i32 = arith.constant 7 : i32
    %214 = arith.index_cast %c7_i32 : i32 to index
    %c0_58 = arith.constant 0 : index
    %c0_59 = arith.constant 0 : index
    %215 = vector.load %arg11[%214, %c0_58, %c0_59] : memref<8x8x384xf32, #tpu.memory_space<vmem>>, vector<1x8x384xf32>
    %216 = vector.shape_cast %215 : vector<1x8x384xf32> to vector<8x384xf32>
    %217 = arith.truncf %213 : vector<8x128xf32> to vector<8x128xbf16>
    %cst_60 = arith.constant dense<0.000000e+00> : vector<8x384xf32>
    %218 = tpu.matmul %217, %16, %cst_60 {dimension_numbers = #tpu.dot_dimension_numbers<[1], [0], [0], [1], [0, 0, 1, 1], [], []>} : vector<8x128xbf16>, vector<128x384xbf16>, vector<8x384xf32> -> vector<8x384xf32>
    %219 = vector.extract_strided_slice %216 {offsets = [0, 0], sizes = [8, 256], strides = [1, 1]} : vector<8x384xf32> to vector<8x256xf32>
    %220 = vector.extract_strided_slice %218 {offsets = [0, 0], sizes = [8, 256], strides = [1, 1]} : vector<8x384xf32> to vector<8x256xf32>
    %221 = arith.addf %219, %220 : vector<8x256xf32>
    %222 = arith.negf %221 : vector<8x256xf32>
    %223 = math.exp %222 : vector<8x256xf32>
    %cst_61 = arith.constant 1.000000e+00 : f32
    %224 = vector.broadcast %cst_61 : f32 to vector<8x256xf32>
    %225 = arith.addf %224, %223 : vector<8x256xf32>
    %226 = arith.divf %224, %225 : vector<8x256xf32>
    %227 = vector.extract_strided_slice %226 {offsets = [0, 0], sizes = [8, 128], strides = [1, 1]} : vector<8x256xf32> to vector<8x128xf32>
    %228 = vector.extract_strided_slice %226 {offsets = [0, 128], sizes = [8, 128], strides = [1, 1]} : vector<8x256xf32> to vector<8x128xf32>
    %229 = vector.extract_strided_slice %216 {offsets = [0, 256], sizes = [8, 128], strides = [1, 1]} : vector<8x384xf32> to vector<8x128xf32>
    %230 = vector.extract_strided_slice %218 {offsets = [0, 256], sizes = [8, 128], strides = [1, 1]} : vector<8x384xf32> to vector<8x128xf32>
    %231 = arith.addf %230, %15 : vector<8x128xf32>
    %232 = arith.mulf %227, %231 : vector<8x128xf32>
    %233 = arith.addf %229, %232 : vector<8x128xf32>
    %234 = math.tanh %233 : vector<8x128xf32>
    %235 = arith.subf %213, %234 : vector<8x128xf32>
    %236 = arith.mulf %228, %235 : vector<8x128xf32>
    %237 = arith.addf %234, %236 : vector<8x128xf32>
    %c8_i32_62 = arith.constant 8 : i32
    %238 = arith.muli %arg1, %c8_i32_62 : i32
    %239 = arith.addi %238, %c7_i32 : i32
    %c8_i32_63 = arith.constant 8 : i32
    %240 = arith.cmpi slt, %239, %c8_i32_63 : i32
    %241 = arith.select %240, %237, %213 : vector<8x128xf32>
    %c8_i32_64 = arith.constant 8 : i32
    %c0_65 = arith.constant 0 : index
    %c0_66 = arith.constant 0 : index
    %242 = vector.load %arg10[%c0_65, %c0_66] : memref<8x128xf32, #tpu.memory_space<vmem>>, vector<8x128xf32>
    tpu.vector_store %arg10[%c0_65, %c0_66], %241 {strides = array<i32>} : memref<8x128xf32, #tpu.memory_space<vmem>>, vector<8x128xf32>,
    %c0_i32_67 = arith.constant 0 : i32
    %243 = arith.cmpi eq, %arg1, %c0_i32_67 : i32
    %244 = arith.extui %243 : i1 to i32
    %c0_i32_68 = arith.constant 0 : i32
    %245 = arith.cmpi ne, %244, %c0_i32_68 : i32
    scf.if %245 {
      %c0_69 = arith.constant 0 : index
      %c0_70 = arith.constant 0 : index
      %246 = vector.load %arg7[%c0_69, %c0_70] : memref<128x128xf32, #tpu.memory_space<vmem>>, vector<128x128xf32>
      %cst_71 = arith.constant dense<0.000000e+00> : vector<8x128xf32>
      %247 = tpu.matmul %241, %246, %cst_71 {dimension_numbers = #tpu.dot_dimension_numbers<[1], [0], [0], [1], [0, 0, 1, 1], [], []>} : vector<8x128xf32>, vector<128x128xf32>, vector<8x128xf32> -> vector<8x128xf32>
      %c0_72 = arith.constant 0 : index
      %c0_73 = arith.constant 0 : index
      %248 = vector.load %arg8[%c0_72, %c0_73] : memref<1x128xf32, #tpu.memory_space<vmem>>, vector<1x128xf32>
      %249 = vector.broadcast %248 : vector<1x128xf32> to vector<8x128xf32>
      %250 = arith.addf %247, %249 : vector<8x128xf32>
      %c0_74 = arith.constant 0 : index
      %c0_75 = arith.constant 0 : index
      %251 = vector.load %arg9[%c0_74, %c0_75] : memref<8x128xf32, #tpu.memory_space<vmem>>, vector<8x128xf32>
      tpu.vector_store %arg9[%c0_74, %c0_75], %250 {strides = array<i32>} : memref<8x128xf32, #tpu.memory_space<vmem>>, vector<8x128xf32>,
    } else {
    }
    return
  }
  func.func @transform_0(%arg0: i32, %arg1: i32) -> (i32, i32, i32) {
    %c0_i32 = arith.constant 0 : i32
    %c0_i32_0 = arith.constant 0 : i32
    return %arg1, %arg0, %c0_i32 : i32, i32, i32
  }
  func.func @transform_1(%arg0: i32, %arg1: i32) -> (i32, i32) {
    %c0_i32 = arith.constant 0 : i32
    %c0_i32_0 = arith.constant 0 : i32
    %c0_i32_1 = arith.constant 0 : i32
    return %c0_i32, %c0_i32_0 : i32, i32
  }
  func.func @transform_2(%arg0: i32, %arg1: i32) -> (i32, i32) {
    %c0_i32 = arith.constant 0 : i32
    %c0_i32_0 = arith.constant 0 : i32
    %c0_i32_1 = arith.constant 0 : i32
    return %c0_i32, %c0_i32_0 : i32, i32
  }
  func.func @transform_3(%arg0: i32, %arg1: i32) -> (i32, i32) {
    %c0_i32 = arith.constant 0 : i32
    %c0_i32_0 = arith.constant 0 : i32
    %c0_i32_1 = arith.constant 0 : i32
    return %c0_i32, %c0_i32_0 : i32, i32
  }
  func.func @transform_4(%arg0: i32, %arg1: i32) -> (i32, i32) {
    %c0_i32 = arith.constant 0 : i32
    %c0_i32_0 = arith.constant 0 : i32
    %c0_i32_1 = arith.constant 0 : i32
    return %c0_i32, %c0_i32_0 : i32, i32
  }
  func.func @transform_5(%arg0: i32, %arg1: i32) -> (i32, i32) {
    %c0_i32 = arith.constant 0 : i32
    %c0_i32_0 = arith.constant 0 : i32
    %c0_i32_1 = arith.constant 0 : i32
    return %c0_i32, %c0_i32_0 : i32, i32
  }
  func.func @transform_6(%arg0: i32, %arg1: i32) -> (i32, i32) {
    %c0_i32 = arith.constant 0 : i32
    %c0_i32_0 = arith.constant 0 : i32
    %c0_i32_1 = arith.constant 0 : i32
    return %c0_i32, %c0_i32_0 : i32, i32
  }
  func.func @transform_7(%arg0: i32, %arg1: i32) -> (i32, i32) {
    %c0_i32 = arith.constant 0 : i32
    %c0_i32_0 = arith.constant 0 : i32
    return %arg0, %c0_i32 : i32, i32
  }
}

</mosaic_0001>

<llo_original>
// kernel: gru_model_forward.1
$region0: #{gru_model_forward.1}
  #allocation0 [shape = 'u32[]', space=smem, size = 0x4, offset = 0x4, fixed_abs, tag = 'smem constant byte address 0x4 - core index']
  #allocation1 [shape = 'u32[144,128]{1,0:T(1,128)}', space=vmem, size = 0x12000, scoped, tag = 'internal scratch']
  #allocation2 [shape = 'f32[8,128]{1,0:T(8,128)}', space=vmem, size = 0x1000, scoped, tag = 'scratch operand']
  #allocation3 [shape = 'f32[8,8,384]{2,1,0:T(8,128)}', space=vmem, size = 0x18000, scoped, tag = 'scratch operand']
  %s0 = inlined_call_operand.vmem [shape: f32[8,8,16], index: 0, kind: input, shape index: {}]
  %s1 = inlined_call_operand.vmem [shape: bf16[16,384], index: 1, kind: input, shape index: {}]
  %s2 = inlined_call_operand.vmem [shape: f32[1,384], index: 2, kind: input, shape index: {}]
  %s3 = inlined_call_operand.vmem [shape: bf16[128,384], index: 3, kind: input, shape index: {}]
  %s4 = inlined_call_operand.vmem [shape: f32[1,128], index: 4, kind: input, shape index: {}]
  %s5 = inlined_call_operand.vmem [shape: f32[128,128], index: 5, kind: input, shape index: {}]
  %s6 = inlined_call_operand.vmem [shape: f32[1,128], index: 6, kind: input, shape index: {}]
  %s7 = inlined_call_operand.vmem [shape: f32[8,128], index: 7, kind: output, shape index: {}]
  %s8 = sld [smem:[#allocation0]]
  $region46: #{gru_model_forward.1} parent=0
    _
  %s10 = ssub.s32 1, %s8
  %s11 = scalar_select 0, %s10, %s8
  // Predicated region
  $region2: #{gru_model_forward.1} parent=0 // pred_check
    _
  $region3: #{gru_model_forward.1} parent=0 // pred_check_branch
    %13 = sbr.rel (0) target = $region5
  $region4: #{gru_model_forward.1} parent=0 // pred_region
    _
  $region5: #{gru_model_forward.1} parent=0 // pred_fallthru
    _
  // Predicated region
  $region6: #{gru_model_forward.1} parent=0 // pred_check
    _
  $region7: #{gru_model_forward.1} parent=0 // pred_check_branch
    %15 = sbr.rel (0) target = $region9
  $region8: #{gru_model_forward.1} parent=0 // pred_region
    _
  $region9: #{gru_model_forward.1} parent=0 // pred_fallthru
    _
  // Predicated region
  $region10: #{gru_model_forward.1} parent=0 // pred_check
    _
  $region11: #{gru_model_forward.1} parent=0 // pred_check_branch
    %17 = sbr.rel (0) target = $region13
  $region12: #{gru_model_forward.1} parent=0 // pred_region
    _
  $region13: #{gru_model_forward.1} parent=0 // pred_fallthru
    _
  // Predicated region
  $region14: #{gru_model_forward.1} parent=0 // pred_check
    _
  $region15: #{gru_model_forward.1} parent=0 // pred_check_branch
    %19 = sbr.rel (0) target = $region17
  $region16: #{gru_model_forward.1} parent=0 // pred_region
    _
  $region17: #{gru_model_forward.1} parent=0 // pred_fallthru
    _
  // Predicated region
  $region18: #{gru_model_forward.1} parent=0 // pred_check
    _
  $region19: #{gru_model_forward.1} parent=0 // pred_check_branch
    %21 = sbr.rel (0) target = $region21
  $region20: #{gru_model_forward.1} parent=0 // pred_region
    _
  $region21: #{gru_model_forward.1} parent=0 // pred_fallthru
    _
  // Predicated region
  $region22: #{gru_model_forward.1} parent=0 // pred_check
    _
  $region23: #{gru_model_forward.1} parent=0 // pred_check_branch
    %23 = sbr.rel (0) target = $region25
  $region24: #{gru_model_forward.1} parent=0 // pred_region
    _
  $region25: #{gru_model_forward.1} parent=0 // pred_fallthru
    _
  // Predicated region
  $region26: #{gru_model_forward.1} parent=0 // pred_check
    _
  $region27: #{gru_model_forward.1} parent=0 // pred_check_branch
    %25 = sbr.rel (0) target = $region29
  $region28: #{gru_model_forward.1} parent=0 // pred_region
    _
  $region29: #{gru_model_forward.1} parent=0 // pred_fallthru
    _
  %p27 = scmp.eq.s32.totalorder 0, 0
  // Predicated region
  $region30: #{gru_model_forward.1} parent=0 // pred_check
    %p28 = pneg %p27
  $region31: #{gru_model_forward.1} parent=0 // pred_check_branch
    %30 = sbr.rel (%p28) target = $region33
  $region32: #{gru_model_forward.1} parent=0 // pred_region
    %31 = vst [vmem:[#allocation2] sm:$0xff] 0.0
  $region33: #{gru_model_forward.1} parent=0 // pred_fallthru
    _
  %v32 = vld [vmem:[%s0] sm:$0xff]
  %v33 = vld [vmem:[%s0 + $0x8] sm:$0xff]
  %v34 = vld [vmem:[%s0 + $0x10] sm:$0xff]
  %v35 = vld [vmem:[%s0 + $0x18] sm:$0xff]
  %v36 = vld [vmem:[%s0 + $0x20] sm:$0xff]
  %v37 = vld [vmem:[%s0 + $0x28] sm:$0xff]
  %v38 = vld [vmem:[%s0 + $0x30] sm:$0xff]
  %v39 = vld [vmem:[%s0 + $0x38] sm:$0xff]
  %v40 = vpack.c.bf16 %v33, %v32
  %v41 = vpack.c.bf16 %v35, %v34
  %v42 = vpack.c.bf16 %v37, %v36
  %v43 = vpack.c.bf16 %v39, %v38
  %v44 = vld [vmem:[%s1] sm:$0xff]
  %v45 = vld [vmem:[%s1 + $0x8] sm:$0xf]
  %v46 = vld [vmem:[%s1 + $0xc] sm:$0xff]
  %v47 = vld [vmem:[%s1 + $0x14] sm:$0xf]
  %v48 = vld [vmem:[%s2] sm:$0x7]
  %v50 = vlaneseq
  %v51 = vshrl.u32 %v50, 7
  %v52 = vsub.s32 0, %v51
  %v53 = vrot.slane %v48, %v52
  %v54 = vlaneseq
  %v55 = vshrl.u32 %v54, 7
  %v56 = vsub.s32 1, %v55
  %v57 = vrot.slane %v48, %v56
  %v58 = vlaneseq
  %v59 = vshrl.u32 %v58, 7
  %v60 = vsub.s32 2, %v59
  %v61 = vrot.slane %v48, %v60
  %v69 = vunpack.c.l.b16 %v44
  %v70 = vunpack.c.h.b16 %v44
  %v71 = vunpack.c.l.b16 %v45
  %v72 = vunpack.c.l.b16 %v46
  %v73 = vunpack.c.h.b16 %v46
  %v74 = vunpack.c.l.b16 %v47
  %v75 = vpack.c.b16 %v72, %v69
  %v76 = vpack.c.b16 %v73, %v70
  %v77 = vpack.c.b16 %v74, %v71
  %vm81 = vcmask 130048
  %v83 = vsel %vm81, %v40, 0
  %v86 = vsel %vm81, %v41, 0
  %v89 = vsel %vm81, %v42, 0
  %v92 = vsel %vm81, %v43, 0
  %94 = vmatprep.subr.bf16.mxu0 %v76
  %95 = vmatpush1.bf16.msra.mxu0 %v75
  %96 = vmatprep.subr.bf16.mxu0 0
  %97 = vmatpush1.bf16.msra.mxu0 0
  %98 = vmatprep.subr.bf16.mxu0 0
  %99 = vmatpush1.bf16.msra.mxu0 0
  %100 = vmatprep.subr.bf16.mxu0 0
  %101 = vmatpush1.bf16.msra.mxu0 0
  %102 = vmatprep.subr.bf16.mxu0 0
  %103 = vmatpush1.bf16.msra.mxu0 0
  %104 = vmatprep.subr.bf16.mxu0 0
  %105 = vmatpush1.bf16.msra.mxu0 0
  %106 = vmatprep.subr.bf16.mxu0 0
  %107 = vmatpush1.bf16.msra.mxu0 0
  %108 = vmatprep.subr.bf16.mxu0 0
  %109 = vmatpush1.bf16.msra.mxu0 0
  %110 = vmatprep.subr.bf16.mxu0 0
  %111 = vmatpush1.bf16.msra.mxu0 0
  %112 = vmatprep.subr.bf16.mxu0 0
  %113 = vmatpush1.bf16.msra.mxu0 0
  %114 = vmatprep.subr.bf16.mxu0 0
  %115 = vmatpush1.bf16.msra.mxu0 0
  %116 = vmatprep.subr.bf16.mxu0 0
  %117 = vmatpush1.bf16.msra.mxu0 0
  %118 = vmatprep.subr.bf16.mxu0 0
  %119 = vmatpush1.bf16.msra.mxu0 0
  %120 = vmatprep.subr.bf16.mxu0 0
  %121 = vmatpush1.bf16.msra.mxu0 0
  %122 = vmatprep.subr.bf16.mxu0 0
  %123 = vmatpush1.bf16.msra.mxu0 0
  %124 = vmatprep.subr.bf16.mxu0 0
  %125 = vmatpush1.bf16.msra.mxu0 0
  %126 = vmatprep.mubr.bf16.mxu0 0
  %127 = vmatmul.mubr.bf16.gmra.mrb[0].mxu0 %v83
  %v128 = vpop.f32.mrb[0].mxu0
  %v129 = vadd.f32 %v53, %v128
  %v130 = vpop.f32.mrb[0].mxu0
  %v131 = vadd.f32 %v57, %v130
  %v132 = vpop.f32.mrb[0].mxu0
  %v133 = vadd.f32 %v53, %v132
  %v134 = vpop.f32.mrb[0].mxu0
  %v135 = vadd.f32 %v57, %v134
  %136 = vmatprep.mubr.bf16.mxu0 0
  %137 = vmatmul.mubr.bf16.gmra.mrb[0].mxu0 %v86
  %v138 = vpop.f32.mrb[0].mxu0
  %v139 = vadd.f32 %v53, %v138
  %v140 = vpop.f32.mrb[0].mxu0
  %v141 = vadd.f32 %v57, %v140
  %v142 = vpop.f32.mrb[0].mxu0
  %v143 = vadd.f32 %v53, %v142
  %v144 = vpop.f32.mrb[0].mxu0
  %v145 = vadd.f32 %v57, %v144
  %146 = vmatprep.mubr.bf16.mxu0 0
  %147 = vmatmul.mubr.bf16.gmra.mrb[0].mxu0 %v89
  %v148 = vpop.f32.mrb[0].mxu0
  %v149 = vadd.f32 %v53, %v148
  %v150 = vpop.f32.mrb[0].mxu0
  %v151 = vadd.f32 %v57, %v150
  %v152 = vpop.f32.mrb[0].mxu0
  %v153 = vadd.f32 %v53, %v152
  %v154 = vpop.f32.mrb[0].mxu0
  %v155 = vadd.f32 %v57, %v154
  %156 = vmatprep.mubr.bf16.mxu0 0
  %157 = vmatmul.mubr.bf16.gmra.mrb[0].mxu0 %v92
  %v158 = vpop.f32.mrb[0].mxu0
  %v159 = vadd.f32 %v53, %v158
  %v160 = vpop.f32.mrb[0].mxu0
  %v161 = vadd.f32 %v57, %v160
  %v162 = vpop.f32.mrb[0].mxu0
  %v163 = vadd.f32 %v53, %v162
  %v164 = vpop.f32.mrb[0].mxu0
  %v165 = vadd.f32 %v57, %v164
  %166 = vdwg.mxu0
  %167 = vmatprep.subr.bf16.mxu0 0
  %168 = vmatpush1.bf16.msra.mxu0 %v77
  %169 = vmatprep.subr.bf16.mxu0 0
  %170 = vmatpush1.bf16.msra.mxu0 0
  %171 = vmatprep.subr.bf16.mxu0 0
  %172 = vmatpush1.bf16.msra.mxu0 0
  %173 = vmatprep.subr.bf16.mxu0 0
  %174 = vmatpush1.bf16.msra.mxu0 0
  %175 = vmatprep.subr.bf16.mxu0 0
  %176 = vmatpush1.bf16.msra.mxu0 0
  %177 = vmatprep.subr.bf16.mxu0 0
  %178 = vmatpush1.bf16.msra.mxu0 0
  %179 = vmatprep.subr.bf16.mxu0 0
  %180 = vmatpush1.bf16.msra.mxu0 0
  %181 = vmatprep.subr.bf16.mxu0 0
  %182 = vmatpush1.bf16.msra.mxu0 0
  %183 = vmatprep.subr.bf16.mxu0 0
  %184 = vmatpush1.bf16.msra.mxu0 0
  %185 = vmatprep.subr.bf16.mxu0 0
  %186 = vmatpush1.bf16.msra.mxu0 0
  %187 = vmatprep.subr.bf16.mxu0 0
  %188 = vmatpush1.bf16.msra.mxu0 0
  %189 = vmatprep.subr.bf16.mxu0 0
  %190 = vmatpush1.bf16.msra.mxu0 0
  %191 = vmatprep.subr.bf16.mxu0 0
  %192 = vmatpush1.bf16.msra.mxu0 0
  %193 = vmatprep.subr.bf16.mxu0 0
  %194 = vmatpush1.bf16.msra.mxu0 0
  %195 = vmatprep.subr.bf16.mxu0 0
  %196 = vmatpush1.bf16.msra.mxu0 0
  %197 = vmatprep.subr.bf16.mxu0 0
  %198 = vmatpush1.bf16.msra.mxu0 0
  %199 = vmatprep.mubr.bf16.mxu0 0
  %200 = vmatmul.mubr.bf16.gmra.mrb[0].mxu0 %v83
  %v201 = vpop.f32.mrb[0].mxu0
  %v202 = vadd.f32 %v61, %v201
  %v203 = vpop.f32.mrb[0].mxu0
  %v204 = vpop.f32.mrb[0].mxu0
  %v205 = vadd.f32 %v61, %v204
  %v206 = vpop.f32.mrb[0].mxu0
  %207 = vmatprep.mubr.bf16.mxu0 0
  %208 = vmatmul.mubr.bf16.gmra.mrb[0].mxu0 %v86
  %v209 = vpop.f32.mrb[0].mxu0
  %v210 = vadd.f32 %v61, %v209
  %v211 = vpop.f32.mrb[0].mxu0
  %v212 = vpop.f32.mrb[0].mxu0
  %v213 = vadd.f32 %v61, %v212
  %v214 = vpop.f32.mrb[0].mxu0
  %215 = vmatprep.mubr.bf16.mxu0 0
  %216 = vmatmul.mubr.bf16.gmra.mrb[0].mxu0 %v89
  %v217 = vpop.f32.mrb[0].mxu0
  %v218 = vadd.f32 %v61, %v217
  %v219 = vpop.f32.mrb[0].mxu0
  %v220 = vpop.f32.mrb[0].mxu0
  %v221 = vadd.f32 %v61, %v220
  %v222 = vpop.f32.mrb[0].mxu0
  %223 = vmatprep.mubr.bf16.mxu0 0
  %224 = vmatmul.mubr.bf16.gmra.mrb[0].mxu0 %v92
  %v225 = vpop.f32.mrb[0].mxu0
  %v226 = vadd.f32 %v61, %v225
  %v227 = vpop.f32.mrb[0].mxu0
  %v228 = vpop.f32.mrb[0].mxu0
  %v229 = vadd.f32 %v61, %v228
  %v230 = vpop.f32.mrb[0].mxu0
  %231 = vdwg.mxu0
  %232 = vst [vmem:[#allocation3] sm:$0xff] %v129
  %233 = vst [vmem:[#allocation3 + $0x8] sm:$0xff] %v131
  %234 = vst [vmem:[#allocation3 + $0x10] sm:$0xff] %v202
  %235 = vst [vmem:[#allocation3 + $0x18] sm:$0xff] %v133
  %236 = vst [vmem:[#allocation3 + $0x20] sm:$0xff] %v135
  %237 = vst [vmem:[#allocation3 + $0x28] sm:$0xff] %v205
  %238 = vst [vmem:[#allocation3 + $0x30] sm:$0xff] %v139
  %239 = vst [vmem:[#allocation3 + $0x38] sm:$0xff] %v141
  %240 = vst [vmem:[#allocation3 + $0x40] sm:$0xff] %v210
  %241 = vst [vmem:[#allocation3 + $0x48] sm:$0xff] %v143
  %242 = vst [vmem:[#allocation3 + $0x50] sm:$0xff] %v145
  %243 = vst [vmem:[#allocation3 + $0x58] sm:$0xff] %v213
  %244 = vst [vmem:[#allocation3 + $0x60] sm:$0xff] %v149
  %245 = vst [vmem:[#allocation3 + $0x68] sm:$0xff] %v151
  %246 = vst [vmem:[#allocation3 + $0x70] sm:$0xff] %v218
  %247 = vst [vmem:[#allocation3 + $0x78] sm:$0xff] %v153
  %248 = vst [vmem:[#allocation3 + $0x80] sm:$0xff] %v155
  %249 = vst [vmem:[#allocation3 + $0x88] sm:$0xff] %v221
  %250 = vst [vmem:[#allocation3 + $0x90] sm:$0xff] %v159
  %251 = vst [vmem:[#allocation3 + $0x98] sm:$0xff] %v161
  %252 = vst [vmem:[#allocation3 + $0xa0] sm:$0xff] %v226
  %253 = vst [vmem:[#allocation3 + $0xa8] sm:$0xff] %v163
  %254 = vst [vmem:[#allocation3 + $0xb0] sm:$0xff] %v165
  %255 = vst [vmem:[#allocation3 + $0xb8] sm:$0xff] %v229
  %v256 = vld [vmem:[%s4] sm:$0x1]
  %v258 = vlaneseq
  %v259 = vshrl.u32 %v258, 7
  %v260 = vsub.s32 0, %v259
  %v261 = vrot.slane %v256, %v260
  %v263 = vld [vmem:[%s3] sm:$0xff]
  %v264 = vld [vmem:[%s3 + $0x8] sm:$0xf]
  %v265 = vld [vmem:[%s3 + $0xc] sm:$0xff]
  %v266 = vld [vmem:[%s3 + $0x14] sm:$0xf]
  %v267 = vld [vmem:[%s3 + $0x18] sm:$0xff]
  %v268 = vld [vmem:[%s3 + $0x20] sm:$0xf]
  %v269 = vld [vmem:[%s3 + $0x24] sm:$0xff]
  %v270 = vld [vmem:[%s3 + $0x2c] sm:$0xf]
  %v271 = vld [vmem:[%s3 + $0x30] sm:$0xff]
  %v272 = vld [vmem:[%s3 + $0x38] sm:$0xf]
  %v273 = vld [vmem:[%s3 + $0x3c] sm:$0xff]
  %v274 = vld [vmem:[%s3 + $0x44] sm:$0xf]
  %v275 = vld [vmem:[%s3 + $0x48] sm:$0xff]
  %v276 = vld [vmem:[%s3 + $0x50] sm:$0xf]
  %v277 = vld [vmem:[%s3 + $0x54] sm:$0xff]
  %v278 = vld [vmem:[%s3 + $0x5c] sm:$0xf]
  %v279 = vld [vmem:[%s3 + $0x60] sm:$0xff]
  %v280 = vld [vmem:[%s3 + $0x68] sm:$0xf]
  %v281 = vld [vmem:[%s3 + $0x6c] sm:$0xff]
  %v282 = vld [vmem:[%s3 + $0x74] sm:$0xf]
  %v283 = vld [vmem:[%s3 + $0x78] sm:$0xff]
  %v284 = vld [vmem:[%s3 + $0x80] sm:$0xf]
  %v285 = vld [vmem:[%s3 + $0x84] sm:$0xff]
  %v286 = vld [vmem:[%s3 + $0x8c] sm:$0xf]
  %v287 = vld [vmem:[%s3 + $0x90] sm:$0xff]
  %v288 = vld [vmem:[%s3 + $0x98] sm:$0xf]
  %v289 = vld [vmem:[%s3 + $0x9c] sm:$0xff]
  %v290 = vld [vmem:[%s3 + $0xa4] sm:$0xf]
  %v291 = vld [vmem:[%s3 + $0xa8] sm:$0xff]
  %v292 = vld [vmem:[%s3 + $0xb0] sm:$0xf]
  %v293 = vld [vmem:[%s3 + $0xb4] sm:$0xff]
  %v294 = vld [vmem:[%s3 + $0xbc] sm:$0xf]
  %v295 = vld [vmem:[#allocation2] sm:$0xff]
  %v296 = vld [vmem:[#allocation3] sm:$0xff]
  %v297 = vld [vmem:[#allocation3 + $0x8] sm:$0xff]
  %v298 = vld [vmem:[#allocation3 + $0x10] sm:$0xff]
  %v299 = vpack.c.bf16 %v295, %v295
  %v332 = vunpack.c.l.b16 %v263
  %v333 = vunpack.c.h.b16 %v263
  %v334 = vunpack.c.l.b16 %v264
  %v335 = vunpack.c.l.b16 %v265
  %v336 = vunpack.c.h.b16 %v265
  %v337 = vunpack.c.l.b16 %v266
  %v338 = vunpack.c.l.b16 %v267
  %v339 = vunpack.c.h.b16 %v267
  %v340 = vunpack.c.l.b16 %v268
  %v341 = vunpack.c.l.b16 %v269
  %v342 = vunpack.c.h.b16 %v269
  %v343 = vunpack.c.l.b16 %v270
  %v344 = vunpack.c.l.b16 %v271
  %v345 = vunpack.c.h.b16 %v271
  %v346 = vunpack.c.l.b16 %v272
  %v347 = vunpack.c.l.b16 %v273
  %v348 = vunpack.c.h.b16 %v273
  %v349 = vunpack.c.l.b16 %v274
  %v350 = vunpack.c.l.b16 %v275
  %v351 = vunpack.c.h.b16 %v275
  %v352 = vunpack.c.l.b16 %v276
  %v353 = vunpack.c.l.b16 %v277
  %v354 = vunpack.c.h.b16 %v277
  %v355 = vunpack.c.l.b16 %v278
  %v356 = vunpack.c.l.b16 %v279
  %v357 = vunpack.c.h.b16 %v279
  %v358 = vunpack.c.l.b16 %v280
  %v359 = vunpack.c.l.b16 %v281
  %v360 = vunpack.c.h.b16 %v281
  %v361 = vunpack.c.l.b16 %v282
  %v362 = vunpack.c.l.b16 %v283
  %v363 = vunpack.c.h.b16 %v283
  %v364 = vunpack.c.l.b16 %v284
  %v365 = vunpack.c.l.b16 %v285
  %v366 = vunpack.c.h.b16 %v285
  %v367 = vunpack.c.l.b16 %v286
  %v368 = vunpack.c.l.b16 %v287
  %v369 = vunpack.c.h.b16 %v287
  %v370 = vunpack.c.l.b16 %v288
  %v371 = vunpack.c.l.b16 %v289
  %v372 = vunpack.c.h.b16 %v289
  %v373 = vunpack.c.l.b16 %v290
  %v374 = vunpack.c.l.b16 %v291
  %v375 = vunpack.c.h.b16 %v291
  %v376 = vunpack.c.l.b16 %v292
  %v377 = vunpack.c.l.b16 %v293
  %v378 = vunpack.c.h.b16 %v293
  %v379 = vunpack.c.l.b16 %v294
  %v380 = vpack.c.b16 %v335, %v332
  %v381 = vpack.c.b16 %v336, %v333
  %v382 = vpack.c.b16 %v337, %v334
  %v383 = vpack.c.b16 %v341, %v338
  %v384 = vpack.c.b16 %v342, %v339
  %v385 = vpack.c.b16 %v343, %v340
  %v386 = vpack.c.b16 %v347, %v344
  %v387 = vpack.c.b16 %v348, %v345
  %v388 = vpack.c.b16 %v349, %v346
  %v389 = vpack.c.b16 %v353, %v350
  %v390 = vpack.c.b16 %v354, %v351
  %v391 = vpack.c.b16 %v355, %v352
  %v392 = vpack.c.b16 %v359, %v356
  %v393 = vpack.c.b16 %v360, %v357
  %v394 = vpack.c.b16 %v361, %v358
  %v395 = vpack.c.b16 %v365, %v362
  %v396 = vpack.c.b16 %v366, %v363
  %v397 = vpack.c.b16 %v367, %v364
  %v398 = vpack.c.b16 %v371, %v368
  %v399 = vpack.c.b16 %v372, %v369
  %v400 = vpack.c.b16 %v373, %v370
  %v401 = vpack.c.b16 %v377, %v374
  %v402 = vpack.c.b16 %v378, %v375
  %v403 = vpack.c.b16 %v379, %v376
  %428 = vmatprep.subr.bf16.mxu0 %v381
  %429 = vmatpush1.bf16.msra.mxu0 %v380
  %430 = vmatprep.subr.bf16.mxu0 %v384
  %431 = vmatpush1.bf16.msra.mxu0 %v383
  %432 = vmatprep.subr.bf16.mxu0 %v387
  %433 = vmatpush1.bf16.msra.mxu0 %v386
  %434 = vmatprep.subr.bf16.mxu0 %v390
  %435 = vmatpush1.bf16.msra.mxu0 %v389
  %436 = vmatprep.subr.bf16.mxu0 %v393
  %437 = vmatpush1.bf16.msra.mxu0 %v392
  %438 = vmatprep.subr.bf16.mxu0 %v396
  %439 = vmatpush1.bf16.msra.mxu0 %v395
  %440 = vmatprep.subr.bf16.mxu0 %v399
  %441 = vmatpush1.bf16.msra.mxu0 %v398
  %442 = vmatprep.subr.bf16.mxu0 %v402
  %443 = vmatpush1.bf16.msra.mxu0 %v401
  %444 = vmatprep.subr.bf16.mxu0 0
  %445 = vmatpush1.bf16.msra.mxu0 0
  %446 = vmatprep.subr.bf16.mxu0 0
  %447 = vmatpush1.bf16.msra.mxu0 0
  %448 = vmatprep.subr.bf16.mxu0 0
  %449 = vmatpush1.bf16.msra.mxu0 0
  %450 = vmatprep.subr.bf16.mxu0 0
  %451 = vmatpush1.bf16.msra.mxu0 0
  %452 = vmatprep.subr.bf16.mxu0 0
  %453 = vmatpush1.bf16.msra.mxu0 0
  %454 = vmatprep.subr.bf16.mxu0 0
  %455 = vmatpush1.bf16.msra.mxu0 0
  %456 = vmatprep.subr.bf16.mxu0 0
  %457 = vmatpush1.bf16.msra.mxu0 0
  %458 = vmatprep.subr.bf16.mxu0 0
  %459 = vmatpush1.bf16.msra.mxu0 0
  %460 = vmatprep.mubr.bf16.mxu0 0
  %461 = vmatmul.mubr.bf16.gmra.mrb[0].mxu0 %v299
  %v462 = vpop.f32.mrb[0].mxu0
  %v463 = vadd.f32 0.0, %v462
  %v464 = vpop.f32.mrb[0].mxu0
  %v465 = vadd.f32 0.0, %v464
  %v466 = vpop.f32.mrb[0].mxu0
  %v467 = vpop.f32.mrb[0].mxu0
  %468 = vdwg.mxu0
  %469 = vmatprep.subr.bf16.mxu0 0
  %470 = vmatpush1.bf16.msra.mxu0 %v382
  %471 = vmatprep.subr.bf16.mxu0 0
  %472 = vmatpush1.bf16.msra.mxu0 %v385
  %473 = vmatprep.subr.bf16.mxu0 0
  %474 = vmatpush1.bf16.msra.mxu0 %v388
  %475 = vmatprep.subr.bf16.mxu0 0
  %476 = vmatpush1.bf16.msra.mxu0 %v391
  %477 = vmatprep.subr.bf16.mxu0 0
  %478 = vmatpush1.bf16.msra.mxu0 %v394
  %479 = vmatprep.subr.bf16.mxu0 0
  %480 = vmatpush1.bf16.msra.mxu0 %v397
  %481 = vmatprep.subr.bf16.mxu0 0
  %482 = vmatpush1.bf16.msra.mxu0 %v400
  %483 = vmatprep.subr.bf16.mxu0 0
  %484 = vmatpush1.bf16.msra.mxu0 %v403
  %485 = vmatprep.subr.bf16.mxu0 0
  %486 = vmatpush1.bf16.msra.mxu0 0
  %487 = vmatprep.subr.bf16.mxu0 0
  %488 = vmatpush1.bf16.msra.mxu0 0
  %489 = vmatprep.subr.bf16.mxu0 0
  %490 = vmatpush1.bf16.msra.mxu0 0
  %491 = vmatprep.subr.bf16.mxu0 0
  %492 = vmatpush1.bf16.msra.mxu0 0
  %493 = vmatprep.subr.bf16.mxu0 0
  %494 = vmatpush1.bf16.msra.mxu0 0
  %495 = vmatprep.subr.bf16.mxu0 0
  %496 = vmatpush1.bf16.msra.mxu0 0
  %497 = vmatprep.subr.bf16.mxu0 0
  %498 = vmatpush1.bf16.msra.mxu0 0
  %499 = vmatprep.subr.bf16.mxu0 0
  %500 = vmatpush1.bf16.msra.mxu0 0
  %501 = vmatprep.mubr.bf16.mxu0 0
  %502 = vmatmul.mubr.bf16.gmra.mrb[0].mxu0 %v299
  %v503 = vpop.f32.mrb[0].mxu0
  %v504 = vadd.f32 0.0, %v503
  %v505 = vpop.f32.mrb[0].mxu0
  %v506 = vpop.f32.mrb[0].mxu0
  %v507 = vpop.f32.mrb[0].mxu0
  %508 = vdwg.mxu0
  %v509 = vadd.f32 %v296, %v463
  %v510 = vadd.f32 %v297, %v465
  %v511 = vxor.u32 %v509, 2147483648
  %v512 = vxor.u32 %v510, 2147483648
  %v513 = vmul.f32 %v511, 1.442695
  %v514 = vpow.pop %v513
  %v515 = vmul.f32 %v512, 1.442695
  %v516 = vpow.pop %v515
  %v517 = vadd.f32 %v514, 1.0
  %v518 = vadd.f32 %v516, 1.0
  %v519 = vrcp.pop %v517
  %v520 = vmul.f32 1.0, %v519
  %v521 = vrcp.pop %v518
  %v522 = vmul.f32 1.0, %v521
  %v523 = vadd.f32 %v504, %v261
  %v524 = vmul.f32 %v520, %v523
  %v525 = vadd.f32 %v298, %v524
  %v526 = vtanh.pop %v525
  %v527 = vsub.f32 %v295, %v526
  %v528 = vmul.f32 %v522, %v527
  %v529 = vadd.f32 %v526, %v528
  %s530 = smul.u32 0, 8
  %p531 = scmp.lt.s32.totalorder %s530, 8
  %s532 = scalar_select %p531, 1, 0
  %v533 = vstv %s532
  %vm534 = vcmp.eq.s32.totalorder %v533, 1
  %v535 = vsel %vm534, %v529, %v295
  %s536 = scalar_lea.vmem [#allocation3], 24
  %v537 = vld [vmem:[%s536] sm:$0xff]
  %v538 = vld [vmem:[%s536 + $0x8] sm:$0xff]
  %v539 = vld [vmem:[%s536 + $0x10] sm:$0xff]
  %v540 = vpack.c.bf16 %v535, %v535
  %541 = vmatprep.subr.bf16.mxu0 %v381
  %542 = vmatpush1.bf16.msra.mxu0 %v380
  %543 = vmatprep.subr.bf16.mxu0 %v384
  %544 = vmatpush1.bf16.msra.mxu0 %v383
  %545 = vmatprep.subr.bf16.mxu0 %v387
  %546 = vmatpush1.bf16.msra.mxu0 %v386
  %547 = vmatprep.subr.bf16.mxu0 %v390
  %548 = vmatpush1.bf16.msra.mxu0 %v389
  %549 = vmatprep.subr.bf16.mxu0 %v393
  %550 = vmatpush1.bf16.msra.mxu0 %v392
  %551 = vmatprep.subr.bf16.mxu0 %v396
  %552 = vmatpush1.bf16.msra.mxu0 %v395
  %553 = vmatprep.subr.bf16.mxu0 %v399
  %554 = vmatpush1.bf16.msra.mxu0 %v398
  %555 = vmatprep.subr.bf16.mxu0 %v402
  %556 = vmatpush1.bf16.msra.mxu0 %v401
  %557 = vmatprep.subr.bf16.mxu0 0
  %558 = vmatpush1.bf16.msra.mxu0 0
  %559 = vmatprep.subr.bf16.mxu0 0
  %560 = vmatpush1.bf16.msra.mxu0 0
  %561 = vmatprep.subr.bf16.mxu0 0
  %562 = vmatpush1.bf16.msra.mxu0 0
  %563 = vmatprep.subr.bf16.mxu0 0
  %564 = vmatpush1.bf16.msra.mxu0 0
  %565 = vmatprep.subr.bf16.mxu0 0
  %566 = vmatpush1.bf16.msra.mxu0 0
  %567 = vmatprep.subr.bf16.mxu0 0
  %568 = vmatpush1.bf16.msra.mxu0 0
  %569 = vmatprep.subr.bf16.mxu0 0
  %570 = vmatpush1.bf16.msra.mxu0 0
  %571 = vmatprep.subr.bf16.mxu0 0
  %572 = vmatpush1.bf16.msra.mxu0 0
  %573 = vmatprep.mubr.bf16.mxu0 0
  %574 = vmatmul.mubr.bf16.gmra.mrb[0].mxu0 %v540
  %v575 = vpop.f32.mrb[0].mxu0
  %v576 = vadd.f32 0.0, %v575
  %v577 = vpop.f32.mrb[0].mxu0
  %v578 = vadd.f32 0.0, %v577
  %v579 = vpop.f32.mrb[0].mxu0
  %v580 = vpop.f32.mrb[0].mxu0
  %581 = vdwg.mxu0
  %582 = vmatprep.subr.bf16.mxu0 0
  %583 = vmatpush1.bf16.msra.mxu0 %v382
  %584 = vmatprep.subr.bf16.mxu0 0
  %585 = vmatpush1.bf16.msra.mxu0 %v385
  %586 = vmatprep.subr.bf16.mxu0 0
  %587 = vmatpush1.bf16.msra.mxu0 %v388
  %588 = vmatprep.subr.bf16.mxu0 0
  %589 = vmatpush1.bf16.msra.mxu0 %v391
  %590 = vmatprep.subr.bf16.mxu0 0
  %591 = vmatpush1.bf16.msra.mxu0 %v394
  %592 = vmatprep.subr.bf16.mxu0 0
  %593 = vmatpush1.bf16.msra.mxu0 %v397
  %594 = vmatprep.subr.bf16.mxu0 0
  %595 = vmatpush1.bf16.msra.mxu0 %v400
  %596 = vmatprep.subr.bf16.mxu0 0
  %597 = vmatpush1.bf16.msra.mxu0 %v403
  %598 = vmatprep.subr.bf16.mxu0 0
  %599 = vmatpush1.bf16.msra.mxu0 0
  %600 = vmatprep.subr.bf16.mxu0 0
  %601 = vmatpush1.bf16.msra.mxu0 0
  %602 = vmatprep.subr.bf16.mxu0 0
  %603 = vmatpush1.bf16.msra.mxu0 0
  %604 = vmatprep.subr.bf16.mxu0 0
  %605 = vmatpush1.bf16.msra.mxu0 0
  %606 = vmatprep.subr.bf16.mxu0 0
  %607 = vmatpush1.bf16.msra.mxu0 0
  %608 = vmatprep.subr.bf16.mxu0 0
  %609 = vmatpush1.bf16.msra.mxu0 0
  %610 = vmatprep.subr.bf16.mxu0 0
  %611 = vmatpush1.bf16.msra.mxu0 0
  %612 = vmatprep.subr.bf16.mxu0 0
  %613 = vmatpush1.bf16.msra.mxu0 0
  %614 = vmatprep.mubr.bf16.mxu0 0
  %615 = vmatmul.mubr.bf16.gmra.mrb[0].mxu0 %v540
  %v616 = vpop.f32.mrb[0].mxu0
  %v617 = vadd.f32 0.0, %v616
  %v618 = vpop.f32.mrb[0].mxu0
  %v619 = vpop.f32.mrb[0].mxu0
  %v620 = vpop.f32.mrb[0].mxu0
  %621 = vdwg.mxu0
  %v622 = vadd.f32 %v537, %v576
  %v623 = vadd.f32 %v538, %v578
  %v624 = vxor.u32 %v622, 2147483648
  %v625 = vxor.u32 %v623, 2147483648
  %v626 = vmul.f32 %v624, 1.442695
  %v627 = vpow.pop %v626
  %v628 = vmul.f32 %v625, 1.442695
  %v629 = vpow.pop %v628
  %v630 = vadd.f32 %v627, 1.0
  %v631 = vadd.f32 %v629, 1.0
  %v632 = vrcp.pop %v630
  %v633 = vmul.f32 1.0, %v632
  %v634 = vrcp.pop %v631
  %v635 = vmul.f32 1.0, %v634
  %v636 = vadd.f32 %v617, %v261
  %v637 = vmul.f32 %v633, %v636
  %v638 = vadd.f32 %v539, %v637
  %v639 = vtanh.pop %v638
  %v640 = vsub.f32 %v535, %v639
  %v641 = vmul.f32 %v635, %v640
  %v642 = vadd.f32 %v639, %v641
  %s643 = sadd.s32 %s530, 1
  %p644 = scmp.lt.s32.totalorder %s643, 8
  %s645 = scalar_select %p644, 1, 0
  %v646 = vstv %s645
  %vm647 = vcmp.eq.s32.totalorder %v646, 1
  %v648 = vsel %vm647, %v642, %v535
  %s649 = scalar_lea.vmem [#allocation3], 48
  %v650 = vld [vmem:[%s649] sm:$0xff]
  %v651 = vld [vmem:[%s649 + $0x8] sm:$0xff]
  %v652 = vld [vmem:[%s649 + $0x10] sm:$0xff]
  %v653 = vpack.c.bf16 %v648, %v648
  %654 = vmatprep.subr.bf16.mxu0 %v381
  %655 = vmatpush1.bf16.msra.mxu0 %v380
  %656 = vmatprep.subr.bf16.mxu0 %v384
  %657 = vmatpush1.bf16.msra.mxu0 %v383
  %658 = vmatprep.subr.bf16.mxu0 %v387
  %659 = vmatpush1.bf16.msra.mxu0 %v386
  %660 = vmatprep.subr.bf16.mxu0 %v390
  %661 = vmatpush1.bf16.msra.mxu0 %v389
  %662 = vmatprep.subr.bf16.mxu0 %v393
  %663 = vmatpush1.bf16.msra.mxu0 %v392
  %664 = vmatprep.subr.bf16.mxu0 %v396
  %665 = vmatpush1.bf16.msra.mxu0 %v395
  %666 = vmatprep.subr.bf16.mxu0 %v399
  %667 = vmatpush1.bf16.msra.mxu0 %v398
  %668 = vmatprep.subr.bf16.mxu0 %v402
  %669 = vmatpush1.bf16.msra.mxu0 %v401
  %670 = vmatprep.subr.bf16.mxu0 0
  %671 = vmatpush1.bf16.msra.mxu0 0
  %672 = vmatprep.subr.bf16.mxu0 0
  %673 = vmatpush1.bf16.msra.mxu0 0
  %674 = vmatprep.subr.bf16.mxu0 0
  %675 = vmatpush1.bf16.msra.mxu0 0
  %676 = vmatprep.subr.bf16.mxu0 0
  %677 = vmatpush1.bf16.msra.mxu0 0
  %678 = vmatprep.subr.bf16.mxu0 0
  %679 = vmatpush1.bf16.msra.mxu0 0
  %680 = vmatprep.subr.bf16.mxu0 0
  %681 = vmatpush1.bf16.msra.mxu0 0
  %682 = vmatprep.subr.bf16.mxu0 0
  %683 = vmatpush1.bf16.msra.mxu0 0
  %684 = vmatprep.subr.bf16.mxu0 0
  %685 = vmatpush1.bf16.msra.mxu0 0
  %686 = vmatprep.mubr.bf16.mxu0 0
  %687 = vmatmul.mubr.bf16.gmra.mrb[0].mxu0 %v653
  %v688 = vpop.f32.mrb[0].mxu0
  %v689 = vadd.f32 0.0, %v688
  %v690 = vpop.f32.mrb[0].mxu0
  %v691 = vadd.f32 0.0, %v690
  %v692 = vpop.f32.mrb[0].mxu0
  %v693 = vpop.f32.mrb[0].mxu0
  %694 = vdwg.mxu0
  %695 = vmatprep.subr.bf16.mxu0 0
  %696 = vmatpush1.bf16.msra.mxu0 %v382
  %697 = vmatprep.subr.bf16.mxu0 0
  %698 = vmatpush1.bf16.msra.mxu0 %v385
  %699 = vmatprep.subr.bf16.mxu0 0
  %700 = vmatpush1.bf16.msra.mxu0 %v388
  %701 = vmatprep.subr.bf16.mxu0 0
  %702 = vmatpush1.bf16.msra.mxu0 %v391
  %703 = vmatprep.subr.bf16.mxu0 0
  %704 = vmatpush1.bf16.msra.mxu0 %v394
  %705 = vmatprep.subr.bf16.mxu0 0
  %706 = vmatpush1.bf16.msra.mxu0 %v397
  %707 = vmatprep.subr.bf16.mxu0 0
  %708 = vmatpush1.bf16.msra.mxu0 %v400
  %709 = vmatprep.subr.bf16.mxu0 0
  %710 = vmatpush1.bf16.msra.mxu0 %v403
  %711 = vmatprep.subr.bf16.mxu0 0
  %712 = vmatpush1.bf16.msra.mxu0 0
  %713 = vmatprep.subr.bf16.mxu0 0
  %714 = vmatpush1.bf16.msra.mxu0 0
  %715 = vmatprep.subr.bf16.mxu0 0
  %716 = vmatpush1.bf16.msra.mxu0 0
  %717 = vmatprep.subr.bf16.mxu0 0
  %718 = vmatpush1.bf16.msra.mxu0 0
  %719 = vmatprep.subr.bf16.mxu0 0
  %720 = vmatpush1.bf16.msra.mxu0 0
  %721 = vmatprep.subr.bf16.mxu0 0
  %722 = vmatpush1.bf16.msra.mxu0 0
  %723 = vmatprep.subr.bf16.mxu0 0
  %724 = vmatpush1.bf16.msra.mxu0 0
  %725 = vmatprep.subr.bf16.mxu0 0
  %726 = vmatpush1.bf16.msra.mxu0 0
  %727 = vmatprep.mubr.bf16.mxu0 0
  %728 = vmatmul.mubr.bf16.gmra.mrb[0].mxu0 %v653
  %v729 = vpop.f32.mrb[0].mxu0
  %v730 = vadd.f32 0.0, %v729
  %v731 = vpop.f32.mrb[0].mxu0
  %v732 = vpop.f32.mrb[0].mxu0
  %v733 = vpop.f32.mrb[0].mxu0
  %734 = vdwg.mxu0
  %v735 = vadd.f32 %v650, %v689
  %v736 = vadd.f32 %v651, %v691
  %v737 = vxor.u32 %v735, 2147483648
  %v738 = vxor.u32 %v736, 2147483648
  %v739 = vmul.f32 %v737, 1.442695
  %v740 = vpow.pop %v739
  %v741 = vmul.f32 %v738, 1.442695
  %v742 = vpow.pop %v741
  %v743 = vadd.f32 %v740, 1.0
  %v744 = vadd.f32 %v742, 1.0
  %v745 = vrcp.pop %v743
  %v746 = vmul.f32 1.0, %v745
  %v747 = vrcp.pop %v744
  %v748 = vmul.f32 1.0, %v747
  %v749 = vadd.f32 %v730, %v261
  %v750 = vmul.f32 %v746, %v749
  %v751 = vadd.f32 %v652, %v750
  %v752 = vtanh.pop %v751
  %v753 = vsub.f32 %v648, %v752
  %v754 = vmul.f32 %v748, %v753
  %v755 = vadd.f32 %v752, %v754
  %s756 = sadd.s32 %s530, 2
  %p757 = scmp.lt.s32.totalorder %s756, 8
  %s758 = scalar_select %p757, 1, 0
  %v759 = vstv %s758
  %vm760 = vcmp.eq.s32.totalorder %v759, 1
  %v761 = vsel %vm760, %v755, %v648
  %s762 = scalar_lea.vmem [#allocation3], 72
  %v763 = vld [vmem:[%s762] sm:$0xff]
  %v764 = vld [vmem:[%s762 + $0x8] sm:$0xff]
  %v765 = vld [vmem:[%s762 + $0x10] sm:$0xff]
  %v766 = vpack.c.bf16 %v761, %v761
  %767 = vmatprep.subr.bf16.mxu0 %v381
  %768 = vmatpush1.bf16.msra.mxu0 %v380
  %769 = vmatprep.subr.bf16.mxu0 %v384
  %770 = vmatpush1.bf16.msra.mxu0 %v383
  %771 = vmatprep.subr.bf16.mxu0 %v387
  %772 = vmatpush1.bf16.msra.mxu0 %v386
  %773 = vmatprep.subr.bf16.mxu0 %v390
  %774 = vmatpush1.bf16.msra.mxu0 %v389
  %775 = vmatprep.subr.bf16.mxu0 %v393
  %776 = vmatpush1.bf16.msra.mxu0 %v392
  %777 = vmatprep.subr.bf16.mxu0 %v396
  %778 = vmatpush1.bf16.msra.mxu0 %v395
  %779 = vmatprep.subr.bf16.mxu0 %v399
  %780 = vmatpush1.bf16.msra.mxu0 %v398
  %781 = vmatprep.subr.bf16.mxu0 %v402
  %782 = vmatpush1.bf16.msra.mxu0 %v401
  %783 = vmatprep.subr.bf16.mxu0 0
  %784 = vmatpush1.bf16.msra.mxu0 0
  %785 = vmatprep.subr.bf16.mxu0 0
  %786 = vmatpush1.bf16.msra.mxu0 0
  %787 = vmatprep.subr.bf16.mxu0 0
  %788 = vmatpush1.bf16.msra.mxu0 0
  %789 = vmatprep.subr.bf16.mxu0 0
  %790 = vmatpush1.bf16.msra.mxu0 0
  %791 = vmatprep.subr.bf16.mxu0 0
  %792 = vmatpush1.bf16.msra.mxu0 0
  %793 = vmatprep.subr.bf16.mxu0 0
  %794 = vmatpush1.bf16.msra.mxu0 0
  %795 = vmatprep.subr.bf16.mxu0 0
  %796 = vmatpush1.bf16.msra.mxu0 0
  %797 = vmatprep.subr.bf16.mxu0 0
  %798 = vmatpush1.bf16.msra.mxu0 0
  %799 = vmatprep.mubr.bf16.mxu0 0
  %800 = vmatmul.mubr.bf16.gmra.mrb[0].mxu0 %v766
  %v801 = vpop.f32.mrb[0].mxu0
  %v802 = vadd.f32 0.0, %v801
  %v803 = vpop.f32.mrb[0].mxu0
  %v804 = vadd.f32 0.0, %v803
  %v805 = vpop.f32.mrb[0].mxu0
  %v806 = vpop.f32.mrb[0].mxu0
  %807 = vdwg.mxu0
  %808 = vmatprep.subr.bf16.mxu0 0
  %809 = vmatpush1.bf16.msra.mxu0 %v382
  %810 = vmatprep.subr.bf16.mxu0 0
  %811 = vmatpush1.bf16.msra.mxu0 %v385
  %812 = vmatprep.subr.bf16.mxu0 0
  %813 = vmatpush1.bf16.msra.mxu0 %v388
  %814 = vmatprep.subr.bf16.mxu0 0
  %815 = vmatpush1.bf16.msra.mxu0 %v391
  %816 = vmatprep.subr.bf16.mxu0 0
  %817 = vmatpush1.bf16.msra.mxu0 %v394
  %818 = vmatprep.subr.bf16.mxu0 0
  %819 = vmatpush1.bf16.msra.mxu0 %v397
  %820 = vmatprep.subr.bf16.mxu0 0
  %821 = vmatpush1.bf16.msra.mxu0 %v400
  %822 = vmatprep.subr.bf16.mxu0 0
  %823 = vmatpush1.bf16.msra.mxu0 %v403
  %824 = vmatprep.subr.bf16.mxu0 0
  %825 = vmatpush1.bf16.msra.mxu0 0
  %826 = vmatprep.subr.bf16.mxu0 0
  %827 = vmatpush1.bf16.msra.mxu0 0
  %828 = vmatprep.subr.bf16.mxu0 0
  %829 = vmatpush1.bf16.msra.mxu0 0
  %830 = vmatprep.subr.bf16.mxu0 0
  %831 = vmatpush1.bf16.msra.mxu0 0
  %832 = vmatprep.subr.bf16.mxu0 0
  %833 = vmatpush1.bf16.msra.mxu0 0
  %834 = vmatprep.subr.bf16.mxu0 0
  %835 = vmatpush1.bf16.msra.mxu0 0
  %836 = vmatprep.subr.bf16.mxu0 0
  %837 = vmatpush1.bf16.msra.mxu0 0
  %838 = vmatprep.subr.bf16.mxu0 0
  %839 = vmatpush1.bf16.msra.mxu0 0
  %840 = vmatprep.mubr.bf16.mxu0 0
  %841 = vmatmul.mubr.bf16.gmra.mrb[0].mxu0 %v766
  %v842 = vpop.f32.mrb[0].mxu0
  %v843 = vadd.f32 0.0, %v842
  %v844 = vpop.f32.mrb[0].mxu0
  %v845 = vpop.f32.mrb[0].mxu0
  %v846 = vpop.f32.mrb[0].mxu0
  %847 = vdwg.mxu0
  %v848 = vadd.f32 %v763, %v802
  %v849 = vadd.f32 %v764, %v804
  %v850 = vxor.u32 %v848, 2147483648
  %v851 = vxor.u32 %v849, 2147483648
  %v852 = vmul.f32 %v850, 1.442695
  %v853 = vpow.pop %v852
  %v854 = vmul.f32 %v851, 1.442695
  %v855 = vpow.pop %v854
  %v856 = vadd.f32 %v853, 1.0
  %v857 = vadd.f32 %v855, 1.0
  %v858 = vrcp.pop %v856
  %v859 = vmul.f32 1.0, %v858
  %v860 = vrcp.pop %v857
  %v861 = vmul.f32 1.0, %v860
  %v862 = vadd.f32 %v843, %v261
  %v863 = vmul.f32 %v859, %v862
  %v864 = vadd.f32 %v765, %v863
  %v865 = vtanh.pop %v864
  %v866 = vsub.f32 %v761, %v865
  %v867 = vmul.f32 %v861, %v866
  %v868 = vadd.f32 %v865, %v867
  %s869 = sadd.s32 %s530, 3
  %p870 = scmp.lt.s32.totalorder %s869, 8
  %s871 = scalar_select %p870, 1, 0
  %v872 = vstv %s871
  %vm873 = vcmp.eq.s32.totalorder %v872, 1
  %v874 = vsel %vm873, %v868, %v761
  %s875 = scalar_lea.vmem [#allocation3], 96
  %v876 = vld [vmem:[%s875] sm:$0xff]
  %v877 = vld [vmem:[%s875 + $0x8] sm:$0xff]
  %v878 = vld [vmem:[%s875 + $0x10] sm:$0xff]
  %v879 = vpack.c.bf16 %v874, %v874
  %880 = vmatprep.subr.bf16.mxu0 %v381
  %881 = vmatpush1.bf16.msra.mxu0 %v380
  %882 = vmatprep.subr.bf16.mxu0 %v384
  %883 = vmatpush1.bf16.msra.mxu0 %v383
  %884 = vmatprep.subr.bf16.mxu0 %v387
  %885 = vmatpush1.bf16.msra.mxu0 %v386
  %886 = vmatprep.subr.bf16.mxu0 %v390
  %887 = vmatpush1.bf16.msra.mxu0 %v389
  %888 = vmatprep.subr.bf16.mxu0 %v393
  %889 = vmatpush1.bf16.msra.mxu0 %v392
  %890 = vmatprep.subr.bf16.mxu0 %v396
  %891 = vmatpush1.bf16.msra.mxu0 %v395
  %892 = vmatprep.subr.bf16.mxu0 %v399
  %893 = vmatpush1.bf16.msra.mxu0 %v398
  %894 = vmatprep.subr.bf16.mxu0 %v402
  %895 = vmatpush1.bf16.msra.mxu0 %v401
  %896 = vmatprep.subr.bf16.mxu0 0
  %897 = vmatpush1.bf16.msra.mxu0 0
  %898 = vmatprep.subr.bf16.mxu0 0
  %899 = vmatpush1.bf16.msra.mxu0 0
  %900 = vmatprep.subr.bf16.mxu0 0
  %901 = vmatpush1.bf16.msra.mxu0 0
  %902 = vmatprep.subr.bf16.mxu0 0
  %903 = vmatpush1.bf16.msra.mxu0 0
  %904 = vmatprep.subr.bf16.mxu0 0
  %905 = vmatpush1.bf16.msra.mxu0 0
  %906 = vmatprep.subr.bf16.mxu0 0
  %907 = vmatpush1.bf16.msra.mxu0 0
  %908 = vmatprep.subr.bf16.mxu0 0
  %909 = vmatpush1.bf16.msra.mxu0 0
  %910 = vmatprep.subr.bf16.mxu0 0
  %911 = vmatpush1.bf16.msra.mxu0 0
  %912 = vmatprep.mubr.bf16.mxu0 0
  %913 = vmatmul.mubr.bf16.gmra.mrb[0].mxu0 %v879
  %v914 = vpop.f32.mrb[0].mxu0
  %v915 = vadd.f32 0.0, %v914
  %v916 = vpop.f32.mrb[0].mxu0
  %v917 = vadd.f32 0.0, %v916
  %v918 = vpop.f32.mrb[0].mxu0
  %v919 = vpop.f32.mrb[0].mxu0
  %920 = vdwg.mxu0
  %921 = vmatprep.subr.bf16.mxu0 0
  %922 = vmatpush1.bf16.msra.mxu0 %v382
  %923 = vmatprep.subr.bf16.mxu0 0
  %924 = vmatpush1.bf16.msra.mxu0 %v385
  %925 = vmatprep.subr.bf16.mxu0 0
  %926 = vmatpush1.bf16.msra.mxu0 %v388
  %927 = vmatprep.subr.bf16.mxu0 0
  %928 = vmatpush1.bf16.msra.mxu0 %v391
  %929 = vmatprep.subr.bf16.mxu0 0
  %930 = vmatpush1.bf16.msra.mxu0 %v394
  %931 = vmatprep.subr.bf16.mxu0 0
  %932 = vmatpush1.bf16.msra.mxu0 %v397
  %933 = vmatprep.subr.bf16.mxu0 0
  %934 = vmatpush1.bf16.msra.mxu0 %v400
  %935 = vmatprep.subr.bf16.mxu0 0
  %936 = vmatpush1.bf16.msra.mxu0 %v403
  %937 = vmatprep.subr.bf16.mxu0 0
  %938 = vmatpush1.bf16.msra.mxu0 0
  %939 = vmatprep.subr.bf16.mxu0 0
  %940 = vmatpush1.bf16.msra.mxu0 0
  %941 = vmatprep.subr.bf16.mxu0 0
  %942 = vmatpush1.bf16.msra.mxu0 0
  %943 = vmatprep.subr.bf16.mxu0 0
  %944 = vmatpush1.bf16.msra.mxu0 0
  %945 = vmatprep.subr.bf16.mxu0 0
  %946 = vmatpush1.bf16.msra.mxu0 0
  %947 = vmatprep.subr.bf16.mxu0 0
  %948 = vmatpush1.bf16.msra.mxu0 0
  %949 = vmatprep.subr.bf16.mxu0 0
  %950 = vmatpush1.bf16.msra.mxu0 0
  %951 = vmatprep.subr.bf16.mxu0 0
  %952 = vmatpush1.bf16.msra.mxu0 0
  %953 = vmatprep.mubr.bf16.mxu0 0
  %954 = vmatmul.mubr.bf16.gmra.mrb[0].mxu0 %v879
  %v955 = vpop.f32.mrb[0].mxu0
  %v956 = vadd.f32 0.0, %v955
  %v957 = vpop.f32.mrb[0].mxu0
  %v958 = vpop.f32.mrb[0].mxu0
  %v959 = vpop.f32.mrb[0].mxu0
  %960 = vdwg.mxu0
  %v961 = vadd.f32 %v876, %v915
  %v962 = vadd.f32 %v877, %v917
  %v963 = vxor.u32 %v961, 2147483648
  %v964 = vxor.u32 %v962, 2147483648
  %v965 = vmul.f32 %v963, 1.442695
  %v966 = vpow.pop %v965
  %v967 = vmul.f32 %v964, 1.442695
  %v968 = vpow.pop %v967
  %v969 = vadd.f32 %v966, 1.0
  %v970 = vadd.f32 %v968, 1.0
  %v971 = vrcp.pop %v969
  %v972 = vmul.f32 1.0, %v971
  %v973 = vrcp.pop %v970
  %v974 = vmul.f32 1.0, %v973
  %v975 = vadd.f32 %v956, %v261
  %v976 = vmul.f32 %v972, %v975
  %v977 = vadd.f32 %v878, %v976
  %v978 = vtanh.pop %v977
  %v979 = vsub.f32 %v874, %v978
  %v980 = vmul.f32 %v974, %v979
  %v981 = vadd.f32 %v978, %v980
  %s982 = sadd.s32 %s530, 4
  %p983 = scmp.lt.s32.totalorder %s982, 8
  %s984 = scalar_select %p983, 1, 0
  %v985 = vstv %s984
  %vm986 = vcmp.eq.s32.totalorder %v985, 1
  %v987 = vsel %vm986, %v981, %v874
  %s988 = scalar_lea.vmem [#allocation3], 120
  %v989 = vld [vmem:[%s988] sm:$0xff]
  %v990 = vld [vmem:[%s988 + $0x8] sm:$0xff]
  %v991 = vld [vmem:[%s988 + $0x10] sm:$0xff]
  %v992 = vpack.c.bf16 %v987, %v987
  %993 = vmatprep.subr.bf16.mxu0 %v381
  %994 = vmatpush1.bf16.msra.mxu0 %v380
  %995 = vmatprep.subr.bf16.mxu0 %v384
  %996 = vmatpush1.bf16.msra.mxu0 %v383
  %997 = vmatprep.subr.bf16.mxu0 %v387
  %998 = vmatpush1.bf16.msra.mxu0 %v386
  %999 = vmatprep.subr.bf16.mxu0 %v390
  %1000 = vmatpush1.bf16.msra.mxu0 %v389
  %1001 = vmatprep.subr.bf16.mxu0 %v393
  %1002 = vmatpush1.bf16.msra.mxu0 %v392
  %1003 = vmatprep.subr.bf16.mxu0 %v396
  %1004 = vmatpush1.bf16.msra.mxu0 %v395
  %1005 = vmatprep.subr.bf16.mxu0 %v399
  %1006 = vmatpush1.bf16.msra.mxu0 %v398
  %1007 = vmatprep.subr.bf16.mxu0 %v402
  %1008 = vmatpush1.bf16.msra.mxu0 %v401
  %1009 = vmatprep.subr.bf16.mxu0 0
  %1010 = vmatpush1.bf16.msra.mxu0 0
  %1011 = vmatprep.subr.bf16.mxu0 0
  %1012 = vmatpush1.bf16.msra.mxu0 0
  %1013 = vmatprep.subr.bf16.mxu0 0
  %1014 = vmatpush1.bf16.msra.mxu0 0
  %1015 = vmatprep.subr.bf16.mxu0 0
  %1016 = vmatpush1.bf16.msra.mxu0 0
  %1017 = vmatprep.subr.bf16.mxu0 0
  %1018 = vmatpush1.bf16.msra.mxu0 0
  %1019 = vmatprep.subr.bf16.mxu0 0
  %1020 = vmatpush1.bf16.msra.mxu0 0
  %1021 = vmatprep.subr.bf16.mxu0 0
  %1022 = vmatpush1.bf16.msra.mxu0 0
  %1023 = vmatprep.subr.bf16.mxu0 0
  %1024 = vmatpush1.bf16.msra.mxu0 0
  %1025 = vmatprep.mubr.bf16.mxu0 0
  %1026 = vmatmul.mubr.bf16.gmra.mrb[0].mxu0 %v992
  %v1027 = vpop.f32.mrb[0].mxu0
  %v1028 = vadd.f32 0.0, %v1027
  %v1029 = vpop.f32.mrb[0].mxu0
  %v1030 = vadd.f32 0.0, %v1029
  %v1031 = vpop.f32.mrb[0].mxu0
  %v1032 = vpop.f32.mrb[0].mxu0
  %1033 = vdwg.mxu0
  %1034 = vmatprep.subr.bf16.mxu0 0
  %1035 = vmatpush1.bf16.msra.mxu0 %v382
  %1036 = vmatprep.subr.bf16.mxu0 0
  %1037 = vmatpush1.bf16.msra.mxu0 %v385
  %1038 = vmatprep.subr.bf16.mxu0 0
  %1039 = vmatpush1.bf16.msra.mxu0 %v388
  %1040 = vmatprep.subr.bf16.mxu0 0
  %1041 = vmatpush1.bf16.msra.mxu0 %v391
  %1042 = vmatprep.subr.bf16.mxu0 0
  %1043 = vmatpush1.bf16.msra.mxu0 %v394
  %1044 = vmatprep.subr.bf16.mxu0 0
  %1045 = vmatpush1.bf16.msra.mxu0 %v397
  %1046 = vmatprep.subr.bf16.mxu0 0
  %1047 = vmatpush1.bf16.msra.mxu0 %v400
  %1048 = vmatprep.subr.bf16.mxu0 0
  %1049 = vmatpush1.bf16.msra.mxu0 %v403
  %1050 = vmatprep.subr.bf16.mxu0 0
  %1051 = vmatpush1.bf16.msra.mxu0 0
  %1052 = vmatprep.subr.bf16.mxu0 0
  %1053 = vmatpush1.bf16.msra.mxu0 0
  %1054 = vmatprep.subr.bf16.mxu0 0
  %1055 = vmatpush1.bf16.msra.mxu0 0
  %1056 = vmatprep.subr.bf16.mxu0 0
  %1057 = vmatpush1.bf16.msra.mxu0 0
  %1058 = vmatprep.subr.bf16.mxu0 0
  %1059 = vmatpush1.bf16.msra.mxu0 0
  %1060 = vmatprep.subr.bf16.mxu0 0
  %1061 = vmatpush1.bf16.msra.mxu0 0
  %1062 = vmatprep.subr.bf16.mxu0 0
  %1063 = vmatpush1.bf16.msra.mxu0 0
  %1064 = vmatprep.subr.bf16.mxu0 0
  %1065 = vmatpush1.bf16.msra.mxu0 0
  %1066 = vmatprep.mubr.bf16.mxu0 0
  %1067 = vmatmul.mubr.bf16.gmra.mrb[0].mxu0 %v992
  %v1068 = vpop.f32.mrb[0].mxu0
  %v1069 = vadd.f32 0.0, %v1068
  %v1070 = vpop.f32.mrb[0].mxu0
  %v1071 = vpop.f32.mrb[0].mxu0
  %v1072 = vpop.f32.mrb[0].mxu0
  %1073 = vdwg.mxu0
  %v1074 = vadd.f32 %v989, %v1028
  %v1075 = vadd.f32 %v990, %v1030
  %v1076 = vxor.u32 %v1074, 2147483648
  %v1077 = vxor.u32 %v1075, 2147483648
  %v1078 = vmul.f32 %v1076, 1.442695
  %v1079 = vpow.pop %v1078
  %v1080 = vmul.f32 %v1077, 1.442695
  %v1081 = vpow.pop %v1080
  %v1082 = vadd.f32 %v1079, 1.0
  %v1083 = vadd.f32 %v1081, 1.0
  %v1084 = vrcp.pop %v1082
  %v1085 = vmul.f32 1.0, %v1084
  %v1086 = vrcp.pop %v1083
  %v1087 = vmul.f32 1.0, %v1086
  %v1088 = vadd.f32 %v1069, %v261
  %v1089 = vmul.f32 %v1085, %v1088
  %v1090 = vadd.f32 %v991, %v1089
  %v1091 = vtanh.pop %v1090
  %v1092 = vsub.f32 %v987, %v1091
  %v1093 = vmul.f32 %v1087, %v1092
  %v1094 = vadd.f32 %v1091, %v1093
  %s1095 = sadd.s32 %s530, 5
  %p1096 = scmp.lt.s32.totalorder %s1095, 8
  %s1097 = scalar_select %p1096, 1, 0
  %v1098 = vstv %s1097
  %vm1099 = vcmp.eq.s32.totalorder %v1098, 1
  %v1100 = vsel %vm1099, %v1094, %v987
  %s1101 = scalar_lea.vmem [#allocation3], 144
  %v1102 = vld [vmem:[%s1101] sm:$0xff]
  %v1103 = vld [vmem:[%s1101 + $0x8] sm:$0xff]
  %v1104 = vld [vmem:[%s1101 + $0x10] sm:$0xff]
  %v1105 = vpack.c.bf16 %v1100, %v1100
  %1106 = vmatprep.subr.bf16.mxu0 %v381
  %1107 = vmatpush1.bf16.msra.mxu0 %v380
  %1108 = vmatprep.subr.bf16.mxu0 %v384
  %1109 = vmatpush1.bf16.msra.mxu0 %v383
  %1110 = vmatprep.subr.bf16.mxu0 %v387
  %1111 = vmatpush1.bf16.msra.mxu0 %v386
  %1112 = vmatprep.subr.bf16.mxu0 %v390
  %1113 = vmatpush1.bf16.msra.mxu0 %v389
  %1114 = vmatprep.subr.bf16.mxu0 %v393
  %1115 = vmatpush1.bf16.msra.mxu0 %v392
  %1116 = vmatprep.subr.bf16.mxu0 %v396
  %1117 = vmatpush1.bf16.msra.mxu0 %v395
  %1118 = vmatprep.subr.bf16.mxu0 %v399
  %1119 = vmatpush1.bf16.msra.mxu0 %v398
  %1120 = vmatprep.subr.bf16.mxu0 %v402
  %1121 = vmatpush1.bf16.msra.mxu0 %v401
  %1122 = vmatprep.subr.bf16.mxu0 0
  %1123 = vmatpush1.bf16.msra.mxu0 0
  %1124 = vmatprep.subr.bf16.mxu0 0
  %1125 = vmatpush1.bf16.msra.mxu0 0
  %1126 = vmatprep.subr.bf16.mxu0 0
  %1127 = vmatpush1.bf16.msra.mxu0 0
  %1128 = vmatprep.subr.bf16.mxu0 0
  %1129 = vmatpush1.bf16.msra.mxu0 0
  %1130 = vmatprep.subr.bf16.mxu0 0
  %1131 = vmatpush1.bf16.msra.mxu0 0
  %1132 = vmatprep.subr.bf16.mxu0 0
  %1133 = vmatpush1.bf16.msra.mxu0 0
  %1134 = vmatprep.subr.bf16.mxu0 0
  %1135 = vmatpush1.bf16.msra.mxu0 0
  %1136 = vmatprep.subr.bf16.mxu0 0
  %1137 = vmatpush1.bf16.msra.mxu0 0
  %1138 = vmatprep.mubr.bf16.mxu0 0
  %1139 = vmatmul.mubr.bf16.gmra.mrb[0].mxu0 %v1105
  %v1140 = vpop.f32.mrb[0].mxu0
  %v1141 = vadd.f32 0.0, %v1140
  %v1142 = vpop.f32.mrb[0].mxu0
  %v1143 = vadd.f32 0.0, %v1142
  %v1144 = vpop.f32.mrb[0].mxu0
  %v1145 = vpop.f32.mrb[0].mxu0
  %1146 = vdwg.mxu0
  %1147 = vmatprep.subr.bf16.mxu0 0
  %1148 = vmatpush1.bf16.msra.mxu0 %v382
  %1149 = vmatprep.subr.bf16.mxu0 0
  %1150 = vmatpush1.bf16.msra.mxu0 %v385
  %1151 = vmatprep.subr.bf16.mxu0 0
  %1152 = vmatpush1.bf16.msra.mxu0 %v388
  %1153 = vmatprep.subr.bf16.mxu0 0
  %1154 = vmatpush1.bf16.msra.mxu0 %v391
  %1155 = vmatprep.subr.bf16.mxu0 0
  %1156 = vmatpush1.bf16.msra.mxu0 %v394
  %1157 = vmatprep.subr.bf16.mxu0 0
  %1158 = vmatpush1.bf16.msra.mxu0 %v397
  %1159 = vmatprep.subr.bf16.mxu0 0
  %1160 = vmatpush1.bf16.msra.mxu0 %v400
  %1161 = vmatprep.subr.bf16.mxu0 0
  %1162 = vmatpush1.bf16.msra.mxu0 %v403
  %1163 = vmatprep.subr.bf16.mxu0 0
  %1164 = vmatpush1.bf16.msra.mxu0 0
  %1165 = vmatprep.subr.bf16.mxu0 0
  %1166 = vmatpush1.bf16.msra.mxu0 0
  %1167 = vmatprep.subr.bf16.mxu0 0
  %1168 = vmatpush1.bf16.msra.mxu0 0
  %1169 = vmatprep.subr.bf16.mxu0 0
  %1170 = vmatpush1.bf16.msra.mxu0 0
  %1171 = vmatprep.subr.bf16.mxu0 0
  %1172 = vmatpush1.bf16.msra.mxu0 0
  %1173 = vmatprep.subr.bf16.mxu0 0
  %1174 = vmatpush1.bf16.msra.mxu0 0
  %1175 = vmatprep.subr.bf16.mxu0 0
  %1176 = vmatpush1.bf16.msra.mxu0 0
  %1177 = vmatprep.subr.bf16.mxu0 0
  %1178 = vmatpush1.bf16.msra.mxu0 0
  %1179 = vmatprep.mubr.bf16.mxu0 0
  %1180 = vmatmul.mubr.bf16.gmra.mrb[0].mxu0 %v1105
  %v1181 = vpop.f32.mrb[0].mxu0
  %v1182 = vadd.f32 0.0, %v1181
  %v1183 = vpop.f32.mrb[0].mxu0
  %v1184 = vpop.f32.mrb[0].mxu0
  %v1185 = vpop.f32.mrb[0].mxu0
  %1186 = vdwg.mxu0
  %v1187 = vadd.f32 %v1102, %v1141
  %v1188 = vadd.f32 %v1103, %v1143
  %v1189 = vxor.u32 %v1187, 2147483648
  %v1190 = vxor.u32 %v1188, 2147483648
  %v1191 = vmul.f32 %v1189, 1.442695
  %v1192 = vpow.pop %v1191
  %v1193 = vmul.f32 %v1190, 1.442695
  %v1194 = vpow.pop %v1193
  %v1195 = vadd.f32 %v1192, 1.0
  %v1196 = vadd.f32 %v1194, 1.0
  %v1197 = vrcp.pop %v1195
  %v1198 = vmul.f32 1.0, %v1197
  %v1199 = vrcp.pop %v1196
  %v1200 = vmul.f32 1.0, %v1199
  %v1201 = vadd.f32 %v1182, %v261
  %v1202 = vmul.f32 %v1198, %v1201
  %v1203 = vadd.f32 %v1104, %v1202
  %v1204 = vtanh.pop %v1203
  %v1205 = vsub.f32 %v1100, %v1204
  %v1206 = vmul.f32 %v1200, %v1205
  %v1207 = vadd.f32 %v1204, %v1206
  %s1208 = sadd.s32 %s530, 6
  %p1209 = scmp.lt.s32.totalorder %s1208, 8
  %s1210 = scalar_select %p1209, 1, 0
  %v1211 = vstv %s1210
  %vm1212 = vcmp.eq.s32.totalorder %v1211, 1
  %v1213 = vsel %vm1212, %v1207, %v1100
  %s1214 = scalar_lea.vmem [#allocation3], 168
  %v1215 = vld [vmem:[%s1214] sm:$0xff]
  %v1216 = vld [vmem:[%s1214 + $0x8] sm:$0xff]
  %v1217 = vld [vmem:[%s1214 + $0x10] sm:$0xff]
  %v1218 = vpack.c.bf16 %v1213, %v1213
  %1219 = vmatprep.subr.bf16.mxu0 %v381
  %1220 = vmatpush1.bf16.msra.mxu0 %v380
  %1221 = vmatprep.subr.bf16.mxu0 %v384
  %1222 = vmatpush1.bf16.msra.mxu0 %v383
  %1223 = vmatprep.subr.bf16.mxu0 %v387
  %1224 = vmatpush1.bf16.msra.mxu0 %v386
  %1225 = vmatprep.subr.bf16.mxu0 %v390
  %1226 = vmatpush1.bf16.msra.mxu0 %v389
  %1227 = vmatprep.subr.bf16.mxu0 %v393
  %1228 = vmatpush1.bf16.msra.mxu0 %v392
  %1229 = vmatprep.subr.bf16.mxu0 %v396
  %1230 = vmatpush1.bf16.msra.mxu0 %v395
  %1231 = vmatprep.subr.bf16.mxu0 %v399
  %1232 = vmatpush1.bf16.msra.mxu0 %v398
  %1233 = vmatprep.subr.bf16.mxu0 %v402
  %1234 = vmatpush1.bf16.msra.mxu0 %v401
  %1235 = vmatprep.subr.bf16.mxu0 0
  %1236 = vmatpush1.bf16.msra.mxu0 0
  %1237 = vmatprep.subr.bf16.mxu0 0
  %1238 = vmatpush1.bf16.msra.mxu0 0
  %1239 = vmatprep.subr.bf16.mxu0 0
  %1240 = vmatpush1.bf16.msra.mxu0 0
  %1241 = vmatprep.subr.bf16.mxu0 0
  %1242 = vmatpush1.bf16.msra.mxu0 0
  %1243 = vmatprep.subr.bf16.mxu0 0
  %1244 = vmatpush1.bf16.msra.mxu0 0
  %1245 = vmatprep.subr.bf16.mxu0 0
  %1246 = vmatpush1.bf16.msra.mxu0 0
  %1247 = vmatprep.subr.bf16.mxu0 0
  %1248 = vmatpush1.bf16.msra.mxu0 0
  %1249 = vmatprep.subr.bf16.mxu0 0
  %1250 = vmatpush1.bf16.msra.mxu0 0
  %1251 = vmatprep.mubr.bf16.mxu0 0
  %1252 = vmatmul.mubr.bf16.gmra.mrb[0].mxu0 %v1218
  %v1253 = vpop.f32.mrb[0].mxu0
  %v1254 = vadd.f32 0.0, %v1253
  %v1255 = vpop.f32.mrb[0].mxu0
  %v1256 = vadd.f32 0.0, %v1255
  %v1257 = vpop.f32.mrb[0].mxu0
  %v1258 = vpop.f32.mrb[0].mxu0
  %1259 = vdwg.mxu0
  %1260 = vmatprep.subr.bf16.mxu0 0
  %1261 = vmatpush1.bf16.msra.mxu0 %v382
  %1262 = vmatprep.subr.bf16.mxu0 0
  %1263 = vmatpush1.bf16.msra.mxu0 %v385
  %1264 = vmatprep.subr.bf16.mxu0 0
  %1265 = vmatpush1.bf16.msra.mxu0 %v388
  %1266 = vmatprep.subr.bf16.mxu0 0
  %1267 = vmatpush1.bf16.msra.mxu0 %v391
  %1268 = vmatprep.subr.bf16.mxu0 0
  %1269 = vmatpush1.bf16.msra.mxu0 %v394
  %1270 = vmatprep.subr.bf16.mxu0 0
  %1271 = vmatpush1.bf16.msra.mxu0 %v397
  %1272 = vmatprep.subr.bf16.mxu0 0
  %1273 = vmatpush1.bf16.msra.mxu0 %v400
  %1274 = vmatprep.subr.bf16.mxu0 0
  %1275 = vmatpush1.bf16.msra.mxu0 %v403
  %1276 = vmatprep.subr.bf16.mxu0 0
  %1277 = vmatpush1.bf16.msra.mxu0 0
  %1278 = vmatprep.subr.bf16.mxu0 0
  %1279 = vmatpush1.bf16.msra.mxu0 0
  %1280 = vmatprep.subr.bf16.mxu0 0
  %1281 = vmatpush1.bf16.msra.mxu0 0
  %1282 = vmatprep.subr.bf16.mxu0 0
  %1283 = vmatpush1.bf16.msra.mxu0 0
  %1284 = vmatprep.subr.bf16.mxu0 0
  %1285 = vmatpush1.bf16.msra.mxu0 0
  %1286 = vmatprep.subr.bf16.mxu0 0
  %1287 = vmatpush1.bf16.msra.mxu0 0
  %1288 = vmatprep.subr.bf16.mxu0 0
  %1289 = vmatpush1.bf16.msra.mxu0 0
  %1290 = vmatprep.subr.bf16.mxu0 0
  %1291 = vmatpush1.bf16.msra.mxu0 0
  %1292 = vmatprep.mubr.bf16.mxu0 0
  %1293 = vmatmul.mubr.bf16.gmra.mrb[0].mxu0 %v1218
  %v1294 = vpop.f32.mrb[0].mxu0
  %v1295 = vadd.f32 0.0, %v1294
  %v1296 = vpop.f32.mrb[0].mxu0
  %v1297 = vpop.f32.mrb[0].mxu0
  %v1298 = vpop.f32.mrb[0].mxu0
  %1299 = vdwg.mxu0
  %v1300 = vadd.f32 %v1215, %v1254
  %v1301 = vadd.f32 %v1216, %v1256
  %v1302 = vxor.u32 %v1300, 2147483648
  %v1303 = vxor.u32 %v1301, 2147483648
  %v1304 = vmul.f32 %v1302, 1.442695
  %v1305 = vpow.pop %v1304
  %v1306 = vmul.f32 %v1303, 1.442695
  %v1307 = vpow.pop %v1306
  %v1308 = vadd.f32 %v1305, 1.0
  %v1309 = vadd.f32 %v1307, 1.0
  %v1310 = vrcp.pop %v1308
  %v1311 = vmul.f32 1.0, %v1310
  %v1312 = vrcp.pop %v1309
  %v1313 = vmul.f32 1.0, %v1312
  %v1314 = vadd.f32 %v1295, %v261
  %v1315 = vmul.f32 %v1311, %v1314
  %v1316 = vadd.f32 %v1217, %v1315
  %v1317 = vtanh.pop %v1316
  %v1318 = vsub.f32 %v1213, %v1317
  %v1319 = vmul.f32 %v1313, %v1318
  %v1320 = vadd.f32 %v1317, %v1319
  %s1321 = sadd.s32 %s530, 7
  %p1322 = scmp.lt.s32.totalorder %s1321, 8
  %s1323 = scalar_select %p1322, 1, 0
  %v1324 = vstv %s1323
  %vm1325 = vcmp.eq.s32.totalorder %v1324, 1
  %v1326 = vsel %vm1325, %v1320, %v1213
  %1327 = vst [vmem:[#allocation2] sm:$0xff] %v1326
  // Predicated region
  $region34: #{gru_model_forward.1} parent=0 // pred_check
    %p1328 = pneg %p27
  $region35: #{gru_model_forward.1} parent=0 // pred_check_branch
    %1330 = sbr.rel (%p1328) target = $region37
  $region36: #{gru_model_forward.1} parent=0 // pred_region
    %v1331 = vld [vmem:[%s5] sm:$0xff]
    %v1332 = vld [vmem:[%s5 + $0x8] sm:$0xff]
    %v1333 = vld [vmem:[%s5 + $0x10] sm:$0xff]
    %v1334 = vld [vmem:[%s5 + $0x18] sm:$0xff]
    %v1335 = vld [vmem:[%s5 + $0x20] sm:$0xff]
    %v1336 = vld [vmem:[%s5 + $0x28] sm:$0xff]
    %v1337 = vld [vmem:[%s5 + $0x30] sm:$0xff]
    %v1338 = vld [vmem:[%s5 + $0x38] sm:$0xff]
    %v1339 = vld [vmem:[%s5 + $0x40] sm:$0xff]
    %v1340 = vld [vmem:[%s5 + $0x48] sm:$0xff]
    %v1341 = vld [vmem:[%s5 + $0x50] sm:$0xff]
    %v1342 = vld [vmem:[%s5 + $0x58] sm:$0xff]
    %v1343 = vld [vmem:[%s5 + $0x60] sm:$0xff]
    %v1344 = vld [vmem:[%s5 + $0x68] sm:$0xff]
    %v1345 = vld [vmem:[%s5 + $0x70] sm:$0xff]
    %v1346 = vld [vmem:[%s5 + $0x78] sm:$0xff]
    %v1347 = vld [vmem:[%s6] sm:$0x1]
    %v1349 = vlaneseq
    %v1350 = vshrl.u32 %v1349, 7
    %v1351 = vsub.s32 0, %v1350
    %v1352 = vrot.slane %v1347, %v1351
    %1354 = vmatprep.subr.mxu0 0.0
    %1355 = vmatpush1.msra.mxu0 %v1331
    %1356 = vmatprep.subr.mxu0 0.0
    %1357 = vmatpush1.msra.mxu0 %v1332
    %1358 = vmatprep.subr.mxu0 0.0
    %1359 = vmatpush1.msra.mxu0 %v1333
    %1360 = vmatprep.subr.mxu0 0.0
    %1361 = vmatpush1.msra.mxu0 %v1334
    %1362 = vmatprep.subr.mxu0 0.0
    %1363 = vmatpush1.msra.mxu0 %v1335
    %1364 = vmatprep.subr.mxu0 0.0
    %1365 = vmatpush1.msra.mxu0 %v1336
    %1366 = vmatprep.subr.mxu0 0.0
    %1367 = vmatpush1.msra.mxu0 %v1337
    %1368 = vmatprep.subr.mxu0 0.0
    %1369 = vmatpush1.msra.mxu0 %v1338
    %1370 = vmatprep.subr.mxu0 0.0
    %1371 = vmatpush1.msra.mxu0 %v1339
    %1372 = vmatprep.subr.mxu0 0.0
    %1373 = vmatpush1.msra.mxu0 %v1340
    %1374 = vmatprep.subr.mxu0 0.0
    %1375 = vmatpush1.msra.mxu0 %v1341
    %1376 = vmatprep.subr.mxu0 0.0
    %1377 = vmatpush1.msra.mxu0 %v1342
    %1378 = vmatprep.subr.mxu0 0.0
    %1379 = vmatpush1.msra.mxu0 %v1343
    %1380 = vmatprep.subr.mxu0 0.0
    %1381 = vmatpush1.msra.mxu0 %v1344
    %1382 = vmatprep.subr.mxu0 0.0
    %1383 = vmatpush1.msra.mxu0 %v1345
    %1384 = vmatprep.subr.mxu0 0.0
    %1385 = vmatpush1.msra.mxu0 %v1346
    %1386 = vmatprep.subr.mxu0 0.0
    %1387 = vmatpush1.msra.mxu0 0.0
    %1388 = vmatprep.subr.mxu0 0.0
    %1389 = vmatpush1.msra.mxu0 0.0
    %1390 = vmatprep.subr.mxu0 0.0
    %1391 = vmatpush1.msra.mxu0 0.0
    %1392 = vmatprep.subr.mxu0 0.0
    %1393 = vmatpush1.msra.mxu0 0.0
    %1394 = vmatprep.subr.mxu0 0.0
    %1395 = vmatpush1.msra.mxu0 0.0
    %1396 = vmatprep.subr.mxu0 0.0
    %1397 = vmatpush1.msra.mxu0 0.0
    %1398 = vmatprep.subr.mxu0 0.0
    %1399 = vmatpush1.msra.mxu0 0.0
    %1400 = vmatprep.subr.mxu0 0.0
    %1401 = vmatpush1.msra.mxu0 0.0
    %1402 = vmatprep.subr.mxu0 0.0
    %1403 = vmatpush1.msra.mxu0 0.0
    %1404 = vmatprep.subr.mxu0 0.0
    %1405 = vmatpush1.msra.mxu0 0.0
    %1406 = vmatprep.subr.mxu0 0.0
    %1407 = vmatpush1.msra.mxu0 0.0
    %1408 = vmatprep.subr.mxu0 0.0
    %1409 = vmatpush1.msra.mxu0 0.0
    %1410 = vmatprep.subr.mxu0 0.0
    %1411 = vmatpush1.msra.mxu0 0.0
    %1412 = vmatprep.subr.mxu0 0.0
    %1413 = vmatpush1.msra.mxu0 0.0
    %1414 = vmatprep.subr.mxu0 0.0
    %1415 = vmatpush1.msra.mxu0 0.0
    %1416 = vmatprep.subr.mxu0 0.0
    %1417 = vmatpush1.msra.mxu0 0.0
    %1418 = vmatprep.mubr.f32.mxu0 0.0
    %1419 = vmatmul.mubr.f32.gmra.mrb[0].mxu0 %v1326
    %v1420 = vpop.f32.mrb[0].mxu0
    %v1421 = vadd.f32 %v1352, %v1420
    %v1422 = vpop.f32.mrb[0].mxu0
    %1423 = vdwg.mxu0
    %1424 = vst [vmem:[%s7] sm:$0xff] %v1421
  $region37: #{gru_model_forward.1} parent=0 // pred_fallthru
    _
  // Predicated region
  $region38: #{gru_model_forward.1} parent=0 // pred_check
    _
  $region39: #{gru_model_forward.1} parent=0 // pred_check_branch
    %1426 = sbr.rel (0) target = $region41
  $region40: #{gru_model_forward.1} parent=0 // pred_region
    _
  $region41: #{gru_model_forward.1} parent=0 // pred_fallthru
    _
  // Predicated region
  $region42: #{gru_model_forward.1} parent=0 // pred_check
    _
  $region43: #{gru_model_forward.1} parent=0 // pred_check_branch
    %1428 = sbr.rel (0) target = $region45
  $region44: #{gru_model_forward.1} parent=0 // pred_region
    _
  $region45: #{gru_model_forward.1} parent=0 // pred_fallthru
    _

</llo_original>
